<compile_context>
chip_gen: v6e
topology: v6e:2x2x1
jax: 0.10.0
libtpu: 0.0.40
codegen_flags: <defaults>
</compile_context>

<pallas_src>
import functools

import jax
import jax.numpy as jnp
from jax import lax
from jax.experimental import pallas as pl
from jax.experimental.pallas import tpu as pltpu


# ----------------------------- Pallas kernels ------------------------------


def _mlp_kernel(z_ref, w1_ref, b1_ref, w2_ref, b2_ref, o_ref):
    """project: Linear -> SiLU -> Linear (all in-kernel)."""
    h = jnp.dot(z_ref[...], w1_ref[...], preferred_element_type=jnp.float32) + b1_ref[...]
    h = h * pl.reciprocal(1.0 + jnp.exp(-h), approx=True)          # SiLU via EUP exp+rcp
    o = jnp.dot(h, w2_ref[...], preferred_element_type=jnp.float32) + b2_ref[...]
    o_ref[...] = o.astype(o_ref.dtype)


def _conv_kernel(*refs, act, batch, has_pos):
    """Fused 3x3 conv stage in transposed (lane-dense) orientation.

    out^T (Cout, N_tile) = W (Cout, 9*Cin) @ taps (9*Cin, N_tile) + bias [+ pos], act.
    N = B*H*W sits in the lane dimension (>=128) so stores are unmasked and the
    whole 3x3xCin contraction is a single K=9*Cin MXU matmul (bf16 in, f32 acc).
    """
    if has_pos:
        taps_ref, w_ref, b_ref, pos_ref, o_ref = refs
    else:
        taps_ref, w_ref, b_ref, o_ref = refs

    acc = jnp.dot(w_ref[...], taps_ref[...], preferred_element_type=jnp.float32)
    acc = acc + b_ref[...]                                          # (Cout, 1) broadcast
    if has_pos:
        pos = pos_ref[...]                                          # (Cout, H*W), untiled
        acc = acc + jnp.concatenate([pos] * batch, axis=1)          # broadcast over batch
    if act == "silu":
        acc = acc * pl.reciprocal(1.0 + jnp.exp(-acc), approx=True)
    else:  # tanh
        acc = jnp.tanh(acc)
    o_ref[...] = acc.astype(o_ref.dtype)


# ------------------------------ wrappers / glue -----------------------------


_CONV_COMPILER_PARAMS = pltpu.CompilerParams(
    dimension_semantics=("parallel",),
    vmem_limit_bytes=32 * 1024 * 1024,
)


def _vmem_spec():
    return pl.BlockSpec(memory_space=pltpu.MemorySpace.VMEM)


def project(z, w1, b1, w2, b2):
    B = z.shape[0]
    out_dim = w2.shape[1]
    return pl.pallas_call(
        _mlp_kernel,
        out_shape=jax.ShapeDtypeStruct((B, out_dim), jnp.float32),
        in_specs=[_vmem_spec() for _ in range(5)],
        out_specs=_vmem_spec(),
    )(z, w1, b1, w2, b2)


def conv3x3_stage(x, w_mat, bias, pos, act, *, transposed):
    """One decoder stage: (zero-insert/)pad -> im2col taps -> fused Pallas matmul.

    x      : (Cin, B, H, W)  channel-major activation (f32)
    w_mat  : (Cout, 9*Cin)   bf16 stride-1-conv matmul form (tap-major, ci minor)
    bias   : (Cout, 1)       f32
    pos    : (Cout, Ho*Wo)   f32 positional embedding, or None
    returns: (Cout, B, Ho, Wo) f32
    """
    Cin, B, H, W = x.shape
    Cout = w_mat.shape[0]
    if transposed:
        # ConvTranspose2d(k=3, s=2, p=1, output_padding=1) == zero-insert between
        # pixels + pad(lo=1, hi=2) + stride-1 conv with the flipped/transposed kernel.
        xpad = lax.pad(x, jnp.float32(0.0),
                       ((0, 0, 0), (0, 0, 0), (1, 2, 1), (1, 2, 1)))
        Ho, Wo = 2 * H, 2 * W
    else:
        xpad = jnp.pad(x, ((0, 0), (0, 0), (1, 1), (1, 1)))
        Ho, Wo = H, W
    N = B * Ho * Wo

    # im2col: 9 shifted views stacked along the contraction axis -> (9*Cin, N), bf16.
    taps = jnp.concatenate(
        [xpad[:, :, dy:dy + Ho, dx:dx + Wo].reshape(Cin, N)
         for dy in range(3) for dx in range(3)],
        axis=0).astype(jnp.bfloat16)

    # Tile the lane (pixel) axis on the large final stage; small stages are one block.
    if pos is None and N > 512 and N % 512 == 0:
        tile_n = 512
    else:
        tile_n = N
    grid = (N // tile_n,)

    in_specs = [
        pl.BlockSpec((9 * Cin, tile_n), lambda j: (0, j)),
        pl.BlockSpec((Cout, 9 * Cin), lambda j: (0, 0)),
        pl.BlockSpec((Cout, 1), lambda j: (0, 0)),
    ]
    args = [taps, w_mat, bias]
    if pos is not None:
        in_specs.append(pl.BlockSpec((Cout, Ho * Wo), lambda j: (0, 0)))
        args.append(pos)

    kern = functools.partial(_conv_kernel, act=act, batch=B, has_pos=pos is not None)
    out = pl.pallas_call(
        kern,
        out_shape=jax.ShapeDtypeStruct((Cout, N), jnp.float32),
        grid=grid,
        in_specs=in_specs,
        out_specs=pl.BlockSpec((Cout, tile_n), lambda j: (0, j)),
        compiler_params=_CONV_COMPILER_PARAMS,
    )(*args)
    return out.reshape(Cout, B, Ho, Wo)


# ------------------------------ parameters ----------------------------------


def init_params(key, in_channels, c_hid, latent_dim):
    """Synthetic parameters in native PyTorch layouts (as a state_dict would give)."""
    ks = iter(jax.random.split(key, 24))

    def w(shape, scale=0.1):
        return scale * jax.random.normal(next(ks), shape, jnp.float32)

    C, IC, L = c_hid, in_channels, latent_dim
    return dict(
        # project: Linear(L, 4C) -> SiLU -> Linear(4C, 2C*4*4)
        lin1_w=w((4 * C, L)), lin1_b=w((4 * C,)),
        lin2_w=w((2 * C * 16, 4 * C)), lin2_b=w((2 * C * 16,)),
        # decode
        convt1_w=w((2 * C, 2 * C, 3, 3)), convt1_b=w((2 * C,)),    # ConvTranspose2d(2C,2C)
        pe1_w=w((2 * C, 2)), pe1_b=w((2 * C,)),
        conv2_w=w((2 * C, 2 * C, 3, 3)), conv2_b=w((2 * C,)),      # Conv2d(2C,2C)
        pe2_w=w((2 * C, 2)), pe2_b=w((2 * C,)),
        convt3_w=w((2 * C, C, 3, 3)), convt3_b=w((C,)),            # ConvTranspose2d(2C,C)
        pe3_w=w((C, 2)), pe3_b=w((C,)),
        conv4_w=w((C, C, 3, 3)), conv4_b=w((C,)),                  # Conv2d(C,C)
        pe4_w=w((C, 2)), pe4_b=w((C,)),
        convt5_w=w((C, IC, 3, 3)), convt5_b=w((IC,)),              # ConvTranspose2d(C,IC)
    )


def _conv_matrix(w):
    # torch Conv2d weight (Cout, Cin, 3, 3) -> (Cout, 9*Cin) matmul form (tap-major).
    cout, cin = w.shape[0], w.shape[1]
    return jnp.transpose(w, (0, 2, 3, 1)).reshape(cout, 9 * cin)


def _convT_matrix(w):
    # torch ConvTranspose2d weight (Cin, Cout, 3, 3): spatial flip + channel swap
    # gives the equivalent stride-1-conv matmul form (Cout, 9*Cin).
    cin, cout = w.shape[0], w.shape[1]
    wf = jnp.flip(w, axis=(2, 3))
    return jnp.transpose(wf, (1, 2, 3, 0)).reshape(cout, 9 * cin)


def _pos_embedding(we, be, n):
    # PositionalEncodingLayer: pos[:, i*n + j] = we @ [lin(i), lin(j)] + be
    lin = jnp.linspace(-1.0, 1.0, n)
    gi = jnp.broadcast_to(lin[:, None], (n, n))   # varies with the row (h) index
    gj = jnp.broadcast_to(lin[None, :], (n, n))   # varies with the col (w) index
    grid = jnp.stack([gi, gj], axis=-1).reshape(n * n, 2)
    return (grid @ we.T + be[None, :]).T          # (C, n*n), f32


def prepare_params(p):
    """Convert PyTorch-layout params into kernel-ready matmul layouts."""
    bf16 = jnp.bfloat16
    return dict(
        W1=p["lin1_w"].T, b1=p["lin1_b"].reshape(1, -1),
        W2=p["lin2_w"].T, b2=p["lin2_b"].reshape(1, -1),
        wm1=_convT_matrix(p["convt1_w"]).astype(bf16), bm1=p["convt1_b"].reshape(-1, 1),
        pos1=_pos_embedding(p["pe1_w"], p["pe1_b"], 8),
        wm2=_conv_matrix(p["conv2_w"]).astype(bf16), bm2=p["conv2_b"].reshape(-1, 1),
        pos2=_pos_embedding(p["pe2_w"], p["pe2_b"], 8),
        wm3=_convT_matrix(p["convt3_w"]).astype(bf16), bm3=p["convt3_b"].reshape(-1, 1),
        pos3=_pos_embedding(p["pe3_w"], p["pe3_b"], 16),
        wm4=_conv_matrix(p["conv4_w"]).astype(bf16), bm4=p["conv4_b"].reshape(-1, 1),
        pos4=_pos_embedding(p["pe4_w"], p["pe4_b"], 16),
        wm5=_convT_matrix(p["convt5_w"]).astype(bf16), bm5=p["convt5_b"].reshape(-1, 1),
    )


# ------------------------------- forward ------------------------------------


def simple_decoder_forward(z, kp, *, c_hid):
    B = z.shape[0]
    C = c_hid

    # self.project: Linear -> SiLU -> Linear   (Pallas MLP kernel)
    h = project(z, kp["W1"], kp["b1"], kp["W2"], kp["b2"])          # (B, 2C*4*4)

    # x.view(B, 2C, 4, 4) (NCHW) -> channel-major (2C, B, 4, 4) for lane-dense convs
    x = h.reshape(B, 2 * C, 4, 4).transpose(1, 0, 2, 3)

    x = conv3x3_stage(x, kp["wm1"], kp["bm1"], kp["pos1"], "silu", transposed=True)   # 4->8
    x = conv3x3_stage(x, kp["wm2"], kp["bm2"], kp["pos2"], "silu", transposed=False)  # 8
    x = conv3x3_stage(x, kp["wm3"], kp["bm3"], kp["pos3"], "silu", transposed=True)   # 8->16
    x = conv3x3_stage(x, kp["wm4"], kp["bm4"], kp["pos4"], "silu", transposed=False)  # 16
    x = conv3x3_stage(x, kp["wm5"], kp["bm5"], None, "tanh", transposed=True)         # 16->32

    return x.transpose(1, 0, 2, 3)                                   # NCHW (B, IC, 32, 32)


if __name__ == "__main__":
    key = jax.random.PRNGKey(0)
    k_params, k_z = jax.random.split(key)

    batch, in_channels, c_hid, latent_dim = 2, 3, 8, 16
    raw_params = init_params(k_params, in_channels, c_hid, latent_dim)
    kparams = prepare_params(raw_params)
    z = jax.random.normal(k_z, (batch, latent_dim), jnp.float32)

    fwd = jax.jit(functools.partial(simple_decoder_forward, c_hid=c_hid))
    out = fwd(z, kparams)
    jax.block_until_ready(out)

    assert out.shape == (batch, in_channels, 32, 32), out.shape
    assert bool(jnp.all(jnp.isfinite(out)))
    print("KERNEL_OK")
</pallas_src>

<mosaic_0001>
module attributes {stable_mosaic.version = 11 : i64} {
  func.func @_mlp_kernel(%arg0: memref<2x16xf32, #tpu.memory_space<vmem>>, %arg1: memref<16x32xf32, #tpu.memory_space<vmem>>, %arg2: memref<1x32xf32, #tpu.memory_space<vmem>>, %arg3: memref<32x256xf32, #tpu.memory_space<vmem>>, %arg4: memref<1x256xf32, #tpu.memory_space<vmem>>, %arg5: memref<2x256xf32, #tpu.memory_space<vmem>>) attributes {dimension_semantics = [], scalar_prefetch = 0 : i64, scratch_operands = 0 : i64, tpu.core_type = #tpu.core_type<tc>} {
    %c0 = arith.constant 0 : index
    %c0_0 = arith.constant 0 : index
    %0 = vector.load %arg0[%c0, %c0_0] : memref<2x16xf32, #tpu.memory_space<vmem>>, vector<2x16xf32>
    %c0_1 = arith.constant 0 : index
    %c0_2 = arith.constant 0 : index
    %1 = vector.load %arg1[%c0_1, %c0_2] : memref<16x32xf32, #tpu.memory_space<vmem>>, vector<16x32xf32>
    %cst = arith.constant dense<0.000000e+00> : vector<2x32xf32>
    %2 = tpu.matmul %0, %1, %cst {dimension_numbers = #tpu.dot_dimension_numbers<[1], [0], [0], [1], [0, 0, 1, 1], [], []>} : vector<2x16xf32>, vector<16x32xf32>, vector<2x32xf32> -> vector<2x32xf32>
    %c0_3 = arith.constant 0 : index
    %c0_4 = arith.constant 0 : index
    %3 = vector.load %arg2[%c0_3, %c0_4] : memref<1x32xf32, #tpu.memory_space<vmem>>, vector<1x32xf32>
    %4 = vector.broadcast %3 : vector<1x32xf32> to vector<2x32xf32>
    %5 = arith.addf %2, %4 : vector<2x32xf32>
    %cst_5 = arith.constant 0.000000e+00 : f32
    %6 = vector.broadcast %cst_5 : f32 to vector<2x32xf32>
    %7 = arith.subf %6, %5 : vector<2x32xf32>
    %8 = math.exp %7 : vector<2x32xf32>
    %cst_6 = arith.constant 1.000000e+00 : f32
    %9 = vector.broadcast %cst_6 : f32 to vector<2x32xf32>
    %10 = arith.addf %9, %8 : vector<2x32xf32>
    %11 = tpu.reciprocal %10 {approx = true} : vector<2x32xf32> -> vector<2x32xf32>
    %12 = arith.mulf %5, %11 : vector<2x32xf32>
    %c0_7 = arith.constant 0 : index
    %c0_8 = arith.constant 0 : index
    %13 = vector.load %arg3[%c0_7, %c0_8] : memref<32x256xf32, #tpu.memory_space<vmem>>, vector<32x256xf32>
    %cst_9 = arith.constant dense<0.000000e+00> : vector<2x256xf32>
    %14 = tpu.matmul %12, %13, %cst_9 {dimension_numbers = #tpu.dot_dimension_numbers<[1], [0], [0], [1], [0, 0, 1, 1], [], []>} : vector<2x32xf32>, vector<32x256xf32>, vector<2x256xf32> -> vector<2x256xf32>
    %c0_10 = arith.constant 0 : index
    %c0_11 = arith.constant 0 : index
    %15 = vector.load %arg4[%c0_10, %c0_11] : memref<1x256xf32, #tpu.memory_space<vmem>>, vector<1x256xf32>
    %16 = vector.broadcast %15 : vector<1x256xf32> to vector<2x256xf32>
    %17 = arith.addf %14, %16 : vector<2x256xf32>
    %c0_12 = arith.constant 0 : index
    %c0_13 = arith.constant 0 : index
    %18 = vector.load %arg5[%c0_12, %c0_13] : memref<2x256xf32, #tpu.memory_space<vmem>>, vector<2x256xf32>
    tpu.vector_store %arg5[%c0_12, %c0_13], %17 {strides = array<i32>} : memref<2x256xf32, #tpu.memory_space<vmem>>, vector<2x256xf32>,
    return
  }
}

module attributes {stable_mosaic.version = 11 : i64} {
  func.func @_conv_kernel(%arg0: i32, %arg1: memref<144x128xbf16, #tpu.memory_space<vmem>>, %arg2: memref<16x144xbf16, #tpu.memory_space<vmem>>, %arg3: memref<16x1xf32, #tpu.memory_space<vmem>>, %arg4: memref<16x64xf32, #tpu.memory_space<vmem>>, %arg5: memref<16x128xf32, #tpu.memory_space<vmem>>) attributes {dimension_semantics = [#tpu.dimension_semantics<parallel>], iteration_bounds = array<i64: 1>, scalar_prefetch = 0 : i64, scratch_operands = 0 : i64, tpu.core_type = #tpu.core_type<tc>, window_params = [{transform_indices = @transform_0, window_bounds = array<i64: 144, 128>}, {pipeline_mode = #tpu.pipeline_mode<synchronous>, transform_indices = @transform_1, window_bounds = array<i64: 16, 144>}, {pipeline_mode = #tpu.pipeline_mode<synchronous>, transform_indices = @transform_2, window_bounds = array<i64: 16, 1>}, {pipeline_mode = #tpu.pipeline_mode<synchronous>, transform_indices = @transform_3, window_bounds = array<i64: 16, 64>}, {transform_indices = @transform_4, window_bounds = array<i64: 16, 128>}]} {
    %c0 = arith.constant 0 : index
    %c0_0 = arith.constant 0 : index
    %0 = vector.load %arg2[%c0, %c0_0] : memref<16x144xbf16, #tpu.memory_space<vmem>>, vector<16x144xbf16>
    %c0_1 = arith.constant 0 : index
    %c0_2 = arith.constant 0 : index
    %1 = vector.load %arg1[%c0_1, %c0_2] : memref<144x128xbf16, #tpu.memory_space<vmem>>, vector<144x128xbf16>
    %cst = arith.constant dense<0.000000e+00> : vector<16x128xf32>
    %2 = tpu.matmul %0, %1, %cst {dimension_numbers = #tpu.dot_dimension_numbers<[1], [0], [0], [1], [0, 0, 1, 1], [], []>} : vector<16x144xbf16>, vector<144x128xbf16>, vector<16x128xf32> -> vector<16x128xf32>
    %c0_3 = arith.constant 0 : index
    %c0_4 = arith.constant 0 : index
    %3 = vector.load %arg3[%c0_3, %c0_4] : memref<16x1xf32, #tpu.memory_space<vmem>>, vector<16x1xf32>
    %4 = vector.broadcast %3 : vector<16x1xf32> to vector<16x128xf32>
    %5 = arith.addf %2, %4 : vector<16x128xf32>
    %c0_5 = arith.constant 0 : index
    %c0_6 = arith.constant 0 : index
    %6 = vector.load %arg4[%c0_5, %c0_6] : memref<16x64xf32, #tpu.memory_space<vmem>>, vector<16x64xf32>
    %7 = tpu.concatenate %6, %6 in 1 : vector<16x64xf32>, vector<16x64xf32> -> vector<16x128xf32>
    %8 = arith.addf %5, %7 : vector<16x128xf32>
    %cst_7 = arith.constant 0.000000e+00 : f32
    %9 = vector.broadcast %cst_7 : f32 to vector<16x128xf32>
    %10 = arith.subf %9, %8 : vector<16x128xf32>
    %11 = math.exp %10 : vector<16x128xf32>
    %cst_8 = arith.constant 1.000000e+00 : f32
    %12 = vector.broadcast %cst_8 : f32 to vector<16x128xf32>
    %13 = arith.addf %12, %11 : vector<16x128xf32>
    %14 = tpu.reciprocal %13 {approx = true} : vector<16x128xf32> -> vector<16x128xf32>
    %15 = arith.mulf %8, %14 : vector<16x128xf32>
    %c0_9 = arith.constant 0 : index
    %c0_10 = arith.constant 0 : index
    %16 = vector.load %arg5[%c0_9, %c0_10] : memref<16x128xf32, #tpu.memory_space<vmem>>, vector<16x128xf32>
    tpu.vector_store %arg5[%c0_9, %c0_10], %15 {strides = array<i32>} : memref<16x128xf32, #tpu.memory_space<vmem>>, vector<16x128xf32>,
    return
  }
  func.func @transform_0(%arg0: i32) -> (i32, i32) {
    %c0_i32 = arith.constant 0 : i32
    %c0_i32_0 = arith.constant 0 : i32
    return %c0_i32, %arg0 : i32, i32
  }
  func.func @transform_1(%arg0: i32) -> (i32, i32) {
    %c0_i32 = arith.constant 0 : i32
    %c0_i32_0 = arith.constant 0 : i32
    %c0_i32_1 = arith.constant 0 : i32
    return %c0_i32, %c0_i32_0 : i32, i32
  }
  func.func @transform_2(%arg0: i32) -> (i32, i32) {
    %c0_i32 = arith.constant 0 : i32
    %c0_i32_0 = arith.constant 0 : i32
    %c0_i32_1 = arith.constant 0 : i32
    return %c0_i32, %c0_i32_0 : i32, i32
  }
  func.func @transform_3(%arg0: i32) -> (i32, i32) {
    %c0_i32 = arith.constant 0 : i32
    %c0_i32_0 = arith.constant 0 : i32
    %c0_i32_1 = arith.constant 0 : i32
    return %c0_i32, %c0_i32_0 : i32, i32
  }
  func.func @transform_4(%arg0: i32) -> (i32, i32) {
    %c0_i32 = arith.constant 0 : i32
    %c0_i32_0 = arith.constant 0 : i32
    return %c0_i32, %arg0 : i32, i32
  }
}

module attributes {stable_mosaic.version = 11 : i64} {
  func.func @_conv_kernel(%arg0: i32, %arg1: memref<144x512xbf16, #tpu.memory_space<vmem>>, %arg2: memref<8x144xbf16, #tpu.memory_space<vmem>>, %arg3: memref<8x1xf32, #tpu.memory_space<vmem>>, %arg4: memref<8x256xf32, #tpu.memory_space<vmem>>, %arg5: memref<8x512xf32, #tpu.memory_space<vmem>>) attributes {dimension_semantics = [#tpu.dimension_semantics<parallel>], iteration_bounds = array<i64: 1>, scalar_prefetch = 0 : i64, scratch_operands = 0 : i64, tpu.core_type = #tpu.core_type<tc>, window_params = [{transform_indices = @transform_0, window_bounds = array<i64: 144, 512>}, {pipeline_mode = #tpu.pipeline_mode<synchronous>, transform_indices = @transform_1, window_bounds = array<i64: 8, 144>}, {pipeline_mode = #tpu.pipeline_mode<synchronous>, transform_indices = @transform_2, window_bounds = array<i64: 8, 1>}, {pipeline_mode = #tpu.pipeline_mode<synchronous>, transform_indices = @transform_3, window_bounds = array<i64: 8, 256>}, {transform_indices = @transform_4, window_bounds = array<i64: 8, 512>}]} {
    %c0 = arith.constant 0 : index
    %c0_0 = arith.constant 0 : index
    %0 = vector.load %arg2[%c0, %c0_0] : memref<8x144xbf16, #tpu.memory_space<vmem>>, vector<8x144xbf16>
    %c0_1 = arith.constant 0 : index
    %c0_2 = arith.constant 0 : index
    %1 = vector.load %arg1[%c0_1, %c0_2] : memref<144x512xbf16, #tpu.memory_space<vmem>>, vector<144x512xbf16>
    %cst = arith.constant dense<0.000000e+00> : vector<8x512xf32>
    %2 = tpu.matmul %0, %1, %cst {dimension_numbers = #tpu.dot_dimension_numbers<[1], [0], [0], [1], [0, 0, 1, 1], [], []>} : vector<8x144xbf16>, vector<144x512xbf16>, vector<8x512xf32> -> vector<8x512xf32>
    %c0_3 = arith.constant 0 : index
    %c0_4 = arith.constant 0 : index
    %3 = vector.load %arg3[%c0_3, %c0_4] : memref<8x1xf32, #tpu.memory_space<vmem>>, vector<8x1xf32>
    %4 = vector.broadcast %3 : vector<8x1xf32> to vector<8x512xf32>
    %5 = arith.addf %2, %4 : vector<8x512xf32>
    %c0_5 = arith.constant 0 : index
    %c0_6 = arith.constant 0 : index
    %6 = vector.load %arg4[%c0_5, %c0_6] : memref<8x256xf32, #tpu.memory_space<vmem>>, vector<8x256xf32>
    %7 = tpu.concatenate %6, %6 in 1 : vector<8x256xf32>, vector<8x256xf32> -> vector<8x512xf32>
    %8 = arith.addf %5, %7 : vector<8x512xf32>
    %cst_7 = arith.constant 0.000000e+00 : f32
    %9 = vector.broadcast %cst_7 : f32 to vector<8x512xf32>
    %10 = arith.subf %9, %8 : vector<8x512xf32>
    %11 = math.exp %10 : vector<8x512xf32>
    %cst_8 = arith.constant 1.000000e+00 : f32
    %12 = vector.broadcast %cst_8 : f32 to vector<8x512xf32>
    %13 = arith.addf %12, %11 : vector<8x512xf32>
    %14 = tpu.reciprocal %13 {approx = true} : vector<8x512xf32> -> vector<8x512xf32>
    %15 = arith.mulf %8, %14 : vector<8x512xf32>
    %c0_9 = arith.constant 0 : index
    %c0_10 = arith.constant 0 : index
    %16 = vector.load %arg5[%c0_9, %c0_10] : memref<8x512xf32, #tpu.memory_space<vmem>>, vector<8x512xf32>
    tpu.vector_store %arg5[%c0_9, %c0_10], %15 {strides = array<i32>} : memref<8x512xf32, #tpu.memory_space<vmem>>, vector<8x512xf32>,
    return
  }
  func.func @transform_0(%arg0: i32) -> (i32, i32) {
    %c0_i32 = arith.constant 0 : i32
    %c0_i32_0 = arith.constant 0 : i32
    return %c0_i32, %arg0 : i32, i32
  }
  func.func @transform_1(%arg0: i32) -> (i32, i32) {
    %c0_i32 = arith.constant 0 : i32
    %c0_i32_0 = arith.constant 0 : i32
    %c0_i32_1 = arith.constant 0 : i32
    return %c0_i32, %c0_i32_0 : i32, i32
  }
  func.func @transform_2(%arg0: i32) -> (i32, i32) {
    %c0_i32 = arith.constant 0 : i32
    %c0_i32_0 = arith.constant 0 : i32
    %c0_i32_1 = arith.constant 0 : i32
    return %c0_i32, %c0_i32_0 : i32, i32
  }
  func.func @transform_3(%arg0: i32) -> (i32, i32) {
    %c0_i32 = arith.constant 0 : i32
    %c0_i32_0 = arith.constant 0 : i32
    %c0_i32_1 = arith.constant 0 : i32
    return %c0_i32, %c0_i32_0 : i32, i32
  }
  func.func @transform_4(%arg0: i32) -> (i32, i32) {
    %c0_i32 = arith.constant 0 : i32
    %c0_i32_0 = arith.constant 0 : i32
    return %c0_i32, %arg0 : i32, i32
  }
}

module attributes {stable_mosaic.version = 11 : i64} {
  func.func @_conv_kernel(%arg0: i32, %arg1: memref<72x512xbf16, #tpu.memory_space<vmem>>, %arg2: memref<8x72xbf16, #tpu.memory_space<vmem>>, %arg3: memref<8x1xf32, #tpu.memory_space<vmem>>, %arg4: memref<8x256xf32, #tpu.memory_space<vmem>>, %arg5: memref<8x512xf32, #tpu.memory_space<vmem>>) attributes {dimension_semantics = [#tpu.dimension_semantics<parallel>], iteration_bounds = array<i64: 1>, scalar_prefetch = 0 : i64, scratch_operands = 0 : i64, tpu.core_type = #tpu.core_type<tc>, window_params = [{transform_indices = @transform_0, window_bounds = array<i64: 72, 512>}, {pipeline_mode = #tpu.pipeline_mode<synchronous>, transform_indices = @transform_1, window_bounds = array<i64: 8, 72>}, {pipeline_mode = #tpu.pipeline_mode<synchronous>, transform_indices = @transform_2, window_bounds = array<i64: 8, 1>}, {pipeline_mode = #tpu.pipeline_mode<synchronous>, transform_indices = @transform_3, window_bounds = array<i64: 8, 256>}, {transform_indices = @transform_4, window_bounds = array<i64: 8, 512>}]} {
    %c0 = arith.constant 0 : index
    %c0_0 = arith.constant 0 : index
    %0 = vector.load %arg2[%c0, %c0_0] : memref<8x72xbf16, #tpu.memory_space<vmem>>, vector<8x72xbf16>
    %c0_1 = arith.constant 0 : index
    %c0_2 = arith.constant 0 : index
    %1 = vector.load %arg1[%c0_1, %c0_2] : memref<72x512xbf16, #tpu.memory_space<vmem>>, vector<72x512xbf16>
    %cst = arith.constant dense<0.000000e+00> : vector<8x512xf32>
    %2 = tpu.matmul %0, %1, %cst {dimension_numbers = #tpu.dot_dimension_numbers<[1], [0], [0], [1], [0, 0, 1, 1], [], []>} : vector<8x72xbf16>, vector<72x512xbf16>, vector<8x512xf32> -> vector<8x512xf32>
    %c0_3 = arith.constant 0 : index
    %c0_4 = arith.constant 0 : index
    %3 = vector.load %arg3[%c0_3, %c0_4] : memref<8x1xf32, #tpu.memory_space<vmem>>, vector<8x1xf32>
    %4 = vector.broadcast %3 : vector<8x1xf32> to vector<8x512xf32>
    %5 = arith.addf %2, %4 : vector<8x512xf32>
    %c0_5 = arith.constant 0 : index
    %c0_6 = arith.constant 0 : index
    %6 = vector.load %arg4[%c0_5, %c0_6] : memref<8x256xf32, #tpu.memory_space<vmem>>, vector<8x256xf32>
    %7 = tpu.concatenate %6, %6 in 1 : vector<8x256xf32>, vector<8x256xf32> -> vector<8x512xf32>
    %8 = arith.addf %5, %7 : vector<8x512xf32>
    %cst_7 = arith.constant 0.000000e+00 : f32
    %9 = vector.broadcast %cst_7 : f32 to vector<8x512xf32>
    %10 = arith.subf %9, %8 : vector<8x512xf32>
    %11 = math.exp %10 : vector<8x512xf32>
    %cst_8 = arith.constant 1.000000e+00 : f32
    %12 = vector.broadcast %cst_8 : f32 to vector<8x512xf32>
    %13 = arith.addf %12, %11 : vector<8x512xf32>
    %14 = tpu.reciprocal %13 {approx = true} : vector<8x512xf32> -> vector<8x512xf32>
    %15 = arith.mulf %8, %14 : vector<8x512xf32>
    %c0_9 = arith.constant 0 : index
    %c0_10 = arith.constant 0 : index
    %16 = vector.load %arg5[%c0_9, %c0_10] : memref<8x512xf32, #tpu.memory_space<vmem>>, vector<8x512xf32>
    tpu.vector_store %arg5[%c0_9, %c0_10], %15 {strides = array<i32>} : memref<8x512xf32, #tpu.memory_space<vmem>>, vector<8x512xf32>,
    return
  }
  func.func @transform_0(%arg0: i32) -> (i32, i32) {
    %c0_i32 = arith.constant 0 : i32
    %c0_i32_0 = arith.constant 0 : i32
    return %c0_i32, %arg0 : i32, i32
  }
  func.func @transform_1(%arg0: i32) -> (i32, i32) {
    %c0_i32 = arith.constant 0 : i32
    %c0_i32_0 = arith.constant 0 : i32
    %c0_i32_1 = arith.constant 0 : i32
    return %c0_i32, %c0_i32_0 : i32, i32
  }
  func.func @transform_2(%arg0: i32) -> (i32, i32) {
    %c0_i32 = arith.constant 0 : i32
    %c0_i32_0 = arith.constant 0 : i32
    %c0_i32_1 = arith.constant 0 : i32
    return %c0_i32, %c0_i32_0 : i32, i32
  }
  func.func @transform_3(%arg0: i32) -> (i32, i32) {
    %c0_i32 = arith.constant 0 : i32
    %c0_i32_0 = arith.constant 0 : i32
    %c0_i32_1 = arith.constant 0 : i32
    return %c0_i32, %c0_i32_0 : i32, i32
  }
  func.func @transform_4(%arg0: i32) -> (i32, i32) {
    %c0_i32 = arith.constant 0 : i32
    %c0_i32_0 = arith.constant 0 : i32
    return %c0_i32, %arg0 : i32, i32
  }
}

module attributes {stable_mosaic.version = 11 : i64} {
  func.func @_conv_kernel(%arg0: i32, %arg1: memref<72x512xbf16, #tpu.memory_space<vmem>>, %arg2: memref<3x72xbf16, #tpu.memory_space<vmem>>, %arg3: memref<3x1xf32, #tpu.memory_space<vmem>>, %arg4: memref<3x512xf32, #tpu.memory_space<vmem>>) attributes {dimension_semantics = [#tpu.dimension_semantics<parallel>], iteration_bounds = array<i64: 4>, scalar_prefetch = 0 : i64, scratch_operands = 0 : i64, tpu.core_type = #tpu.core_type<tc>, window_params = [{transform_indices = @transform_0, window_bounds = array<i64: 72, 512>}, {pipeline_mode = #tpu.pipeline_mode<synchronous>, transform_indices = @transform_1, window_bounds = array<i64: 3, 72>}, {pipeline_mode = #tpu.pipeline_mode<synchronous>, transform_indices = @transform_2, window_bounds = array<i64: 3, 1>}, {transform_indices = @transform_3, window_bounds = array<i64: 3, 512>}]} {
    %c0 = arith.constant 0 : index
    %c0_0 = arith.constant 0 : index
    %0 = vector.load %arg2[%c0, %c0_0] : memref<3x72xbf16, #tpu.memory_space<vmem>>, vector<3x72xbf16>
    %c0_1 = arith.constant 0 : index
    %c0_2 = arith.constant 0 : index
    %1 = vector.load %arg1[%c0_1, %c0_2] : memref<72x512xbf16, #tpu.memory_space<vmem>>, vector<72x512xbf16>
    %cst = arith.constant dense<0.000000e+00> : vector<3x512xf32>
    %2 = tpu.matmul %0, %1, %cst {dimension_numbers = #tpu.dot_dimension_numbers<[1], [0], [0], [1], [0, 0, 1, 1], [], []>} : vector<3x72xbf16>, vector<72x512xbf16>, vector<3x512xf32> -> vector<3x512xf32>
    %c0_3 = arith.constant 0 : index
    %c0_4 = arith.constant 0 : index
    %3 = vector.load %arg3[%c0_3, %c0_4] : memref<3x1xf32, #tpu.memory_space<vmem>>, vector<3x1xf32>
    %4 = vector.broadcast %3 : vector<3x1xf32> to vector<3x512xf32>
    %5 = arith.addf %2, %4 : vector<3x512xf32>
    %6 = math.tanh %5 : vector<3x512xf32>
    %c0_5 = arith.constant 0 : index
    %c0_6 = arith.constant 0 : index
    %7 = vector.load %arg4[%c0_5, %c0_6] : memref<3x512xf32, #tpu.memory_space<vmem>>, vector<3x512xf32>
    tpu.vector_store %arg4[%c0_5, %c0_6], %6 {strides = array<i32>} : memref<3x512xf32, #tpu.memory_space<vmem>>, vector<3x512xf32>,
    return
  }
  func.func @transform_0(%arg0: i32) -> (i32, i32) {
    %c0_i32 = arith.constant 0 : i32
    %c0_i32_0 = arith.constant 0 : i32
    return %c0_i32, %arg0 : i32, i32
  }
  func.func @transform_1(%arg0: i32) -> (i32, i32) {
    %c0_i32 = arith.constant 0 : i32
    %c0_i32_0 = arith.constant 0 : i32
    %c0_i32_1 = arith.constant 0 : i32
    return %c0_i32, %c0_i32_0 : i32, i32
  }
  func.func @transform_2(%arg0: i32) -> (i32, i32) {
    %c0_i32 = arith.constant 0 : i32
    %c0_i32_0 = arith.constant 0 : i32
    %c0_i32_1 = arith.constant 0 : i32
    return %c0_i32, %c0_i32_0 : i32, i32
  }
  func.func @transform_3(%arg0: i32) -> (i32, i32) {
    %c0_i32 = arith.constant 0 : i32
    %c0_i32_0 = arith.constant 0 : i32
    return %c0_i32, %arg0 : i32, i32
  }
}

</mosaic_0001>

<llo_original>
// kernel: simple_decoder_forward.6
$region0: #{simple_decoder_forward.6}
  #allocation0 [shape = 'u32[]', space=smem, size = 0x4, offset = 0x4, fixed_abs, tag = 'smem constant byte address 0x4 - core index']
  #allocation1 [shape = 'u32[144,128]{1,0:T(1,128)}', space=vmem, size = 0x12000, scoped, tag = 'internal scratch']
  %s0 = inlined_call_operand.hbm [shape: f32[2,16], index: 0, kind: input, shape index: {}]
  %s1 = inlined_call_operand.hbm [shape: f32[16,32], index: 1, kind: input, shape index: {}]
  %s2 = inlined_call_operand.vmem [shape: f32[1,32], index: 2, kind: input, shape index: {}]
  %s3 = inlined_call_operand.hbm [shape: f32[32,256], index: 3, kind: input, shape index: {}]
  %s4 = inlined_call_operand.vmem [shape: f32[1,256], index: 4, kind: input, shape index: {}]
  %s5 = inlined_call_operand.vmem [shape: f32[2,256], index: 5, kind: output, shape index: {}]
  %s6 = sld [smem:[#allocation0]]
  $region42: #{simple_decoder_forward.6} parent=0
    _
  %s8 = ssub.s32 1, %s6
  %s9 = scalar_select 0, %s8, %s6
  $region1: #{simple_decoder_forward.6} parent=0
    #allocation2 [shape = 'u8[1024]{0}', space=vmem, size = 0x400, scoped, tag = 'input window, operand 0, single buffered']
    #allocation3 [shape = 's32[1]{0}', space=sflag, size = 0x4, scoped, tag = 'scoped memory for simple_decoder_forward.6']
    #allocation4 [shape = 'u8[8192]{0}', space=vmem, size = 0x2000, scoped, tag = 'input window, operand 1, single buffered']
    #allocation5 [shape = 's32[1]{0}', space=sflag, size = 0x4, scoped, tag = 'scoped memory for simple_decoder_forward.6']
    #allocation6 [shape = 'u8[32768]{0}', space=vmem, size = 0x8000, scoped, tag = 'input window, operand 3, single buffered']
    %10 = vsyncpa [#allocation3], 0
    %11 = vsyncpa [#allocation5], 0
    // Predicated region
    $region2: #{simple_decoder_forward.6} parent=1 // pred_check
      _
    $region3: #{simple_decoder_forward.6} parent=1 // pred_check_branch
      %13 = sbr.rel (0) target = $region5
    $region4: #{simple_decoder_forward.6} parent=1 // pred_region
      %s15 = ssub.s32 32, 32
      %16 = vsyncadd [#allocation3], %s15
      %s18 = sshll.u32 [#allocation2], 4
      %s19 = int_to_ptr.vmem [resolvable:$true] %s18
      %21 = dma.hbm_to_vmem [thread:$0]  %s0, 32, %s19, [#allocation3]
    $region5: #{simple_decoder_forward.6} parent=1 // pred_fallthru
      _
    // Predicated region
    $region6: #{simple_decoder_forward.6} parent=1 // pred_check
      _
    $region7: #{simple_decoder_forward.6} parent=1 // pred_check_branch
      %23 = sbr.rel (0) target = $region9
    $region8: #{simple_decoder_forward.6} parent=1 // pred_region
      %s25 = ssub.s32 256, 256
      %26 = vsyncadd [#allocation5], %s25
      %s27 = sshll.u32 [#allocation4], 4
      %s28 = int_to_ptr.vmem [resolvable:$true] %s27
      %33 = dma.hbm_to_vmem [thread:$0]  %s1, 256, %s28, [#allocation5], 128, 128, 8
    $region9: #{simple_decoder_forward.6} parent=1 // pred_fallthru
      _
    // Predicated region
    $region10: #{simple_decoder_forward.6} parent=1 // pred_check
      _
    $region11: #{simple_decoder_forward.6} parent=1 // pred_check_branch
      %35 = sbr.rel (0) target = $region13
    $region12: #{simple_decoder_forward.6} parent=1 // pred_region
      _
    $region13: #{simple_decoder_forward.6} parent=1 // pred_fallthru
      _
    // Predicated region
    $region14: #{simple_decoder_forward.6} parent=1 // pred_check
      _
    $region15: #{simple_decoder_forward.6} parent=1 // pred_check_branch
      %37 = sbr.rel (0) target = $region17
    $region16: #{simple_decoder_forward.6} parent=1 // pred_region
      %s39 = ssub.s32 1024, 1024
      %40 = vsyncadd [#allocation5], %s39
      %s41 = sshll.u32 [#allocation6], 4
      %s42 = int_to_ptr.vmem [resolvable:$true] %s41
      %47 = dma.hbm_to_vmem [thread:$0]  %s3, 1024, %s42, [#allocation5], 256, 256, 16
    $region17: #{simple_decoder_forward.6} parent=1 // pred_fallthru
      _
    // Predicated region
    $region18: #{simple_decoder_forward.6} parent=1 // pred_check
      _
    $region19: #{simple_decoder_forward.6} parent=1 // pred_check_branch
      %49 = sbr.rel (0) target = $region21
    $region20: #{simple_decoder_forward.6} parent=1 // pred_region
      _
    $region21: #{simple_decoder_forward.6} parent=1 // pred_fallthru
      _
    // Predicated region
    $region22: #{simple_decoder_forward.6} parent=1 // pred_check
      _
    $region23: #{simple_decoder_forward.6} parent=1 // pred_check_branch
      %51 = sbr.rel (0) target = $region25
    $region24: #{simple_decoder_forward.6} parent=1 // pred_region
      %52 = dma.done [#allocation3], 32
    $region25: #{simple_decoder_forward.6} parent=1 // pred_fallthru
      _
    // Predicated region
    $region26: #{simple_decoder_forward.6} parent=1 // pred_check
      _
    $region27: #{simple_decoder_forward.6} parent=1 // pred_check_branch
      %54 = sbr.rel (0) target = $region29
    $region28: #{simple_decoder_forward.6} parent=1 // pred_region
      %55 = dma.done [#allocation5], 256
    $region29: #{simple_decoder_forward.6} parent=1 // pred_fallthru
      _
    // Predicated region
    $region30: #{simple_decoder_forward.6} parent=1 // pred_check
      _
    $region31: #{simple_decoder_forward.6} parent=1 // pred_check_branch
      %57 = sbr.rel (0) target = $region33
    $region32: #{simple_decoder_forward.6} parent=1 // pred_region
      %58 = dma.done [#allocation5], 1024
    $region33: #{simple_decoder_forward.6} parent=1 // pred_fallthru
      _
    %v59 = vld [vmem:[#allocation2] sm:$0x3]
    %v60 = vld [vmem:[#allocation4] sm:$0xff]
    %v61 = vld [vmem:[#allocation4 + $0x8] sm:$0xff]
    %v62 = vld [vmem:[%s2] sm:$0x1]
    %v64 = vlaneseq
    %v65 = vshrl.u32 %v64, 7
    %v66 = vsub.s32 0, %v65
    %v67 = vrot.slane %v62, %v66
    %vm69 = vcmask 130048
    %v71 = vsel %vm69, %v59, 0
    %73 = vmatprep.subr.mxu0 0.0
    %74 = vmatpush1.msra.mxu0 0.0
    %75 = vmatprep.subr.mxu0 0.0
    %76 = vmatpush1.msra.mxu0 0.0
    %77 = vmatprep.subr.mxu0 0.0
    %78 = vmatpush1.msra.mxu0 0.0
    %79 = vmatprep.subr.mxu0 0.0
    %80 = vmatpush1.msra.mxu0 0.0
    %81 = vmatprep.subr.mxu0 0.0
    %82 = vmatpush1.msra.mxu0 0.0
    %83 = vmatprep.subr.mxu0 0.0
    %84 = vmatpush1.msra.mxu0 0.0
    %85 = vmatprep.subr.mxu0 0.0
    %86 = vmatpush1.msra.mxu0 0.0
    %87 = vmatprep.subr.mxu0 0.0
    %88 = vmatpush1.msra.mxu0 0.0
    %89 = vmatprep.subr.mxu0 0.0
    %90 = vmatpush1.msra.mxu0 0.0
    %91 = vmatprep.subr.mxu0 0.0
    %92 = vmatpush1.msra.mxu0 0.0
    %93 = vmatprep.subr.mxu0 0.0
    %94 = vmatpush1.msra.mxu0 0.0
    %95 = vmatprep.subr.mxu0 0.0
    %96 = vmatpush1.msra.mxu0 0.0
    %97 = vmatprep.subr.mxu0 0.0
    %98 = vmatpush1.msra.mxu0 0.0
    %99 = vmatprep.subr.mxu0 0.0
    %100 = vmatpush1.msra.mxu0 0.0
    %101 = vmatprep.subr.mxu0 0.0
    %102 = vmatpush1.msra.mxu0 %v61
    %103 = vmatprep.subr.mxu0 0.0
    %104 = vmatpush1.msra.mxu0 %v60
    %105 = vmatprep.subr.mxu0 0.0
    %106 = vmatpush2.msra.mxu0 0.0
    %107 = vmatprep.subr.mxu0 0.0
    %108 = vmatpush2.msra.mxu0 0.0
    %109 = vmatprep.subr.mxu0 0.0
    %110 = vmatpush2.msra.mxu0 0.0
    %111 = vmatprep.subr.mxu0 0.0
    %112 = vmatpush2.msra.mxu0 0.0
    %113 = vmatprep.subr.mxu0 0.0
    %114 = vmatpush2.msra.mxu0 0.0
    %115 = vmatprep.subr.mxu0 0.0
    %116 = vmatpush2.msra.mxu0 0.0
    %117 = vmatprep.subr.mxu0 0.0
    %118 = vmatpush2.msra.mxu0 0.0
    %119 = vmatprep.subr.mxu0 0.0
    %120 = vmatpush2.msra.mxu0 0.0
    %121 = vmatprep.subr.mxu0 0.0
    %122 = vmatpush2.msra.mxu0 0.0
    %123 = vmatprep.subr.mxu0 0.0
    %124 = vmatpush2.msra.mxu0 0.0
    %125 = vmatprep.subr.mxu0 0.0
    %126 = vmatpush2.msra.mxu0 0.0
    %127 = vmatprep.subr.mxu0 0.0
    %128 = vmatpush2.msra.mxu0 0.0
    %129 = vmatprep.subr.mxu0 0.0
    %130 = vmatpush2.msra.mxu0 0.0
    %131 = vmatprep.subr.mxu0 0.0
    %132 = vmatpush2.msra.mxu0 0.0
    %133 = vmatprep.subr.mxu0 0.0
    %134 = vmatpush2.msra.mxu0 0.0
    %135 = vmatprep.subr.mxu0 0.0
    %136 = vmatpush2.msra.mxu0 0.0
    %137 = vmatprep.mubr.f32.mxu0 0.0
    %138 = vmatmul.mubr.f32.gmra.mxu0 %v71
    %v139 = vpop.f32.mrf.mxu0
    %v140 = vadd.f32 %v67, %v139
    %v141 = vpop.f32.mrf.mxu0
    %142 = vdwg.mxu0
    %v143 = vsub.f32 0.0, %v140
    %v144 = vmul.f32 %v143, 1.442695
    %v145 = vpow.pop %v144
    %v146 = vadd.f32 %v145, 1.0
    %v147 = vrcp.pop %v146
    %v148 = vmul.f32 %v140, %v147
    %v149 = vld [vmem:[#allocation6] sm:$0xff]
    %v150 = vld [vmem:[#allocation6 + $0x8] sm:$0xff]
    %v151 = vld [vmem:[#allocation6 + $0x10] sm:$0xff]
    %v152 = vld [vmem:[#allocation6 + $0x18] sm:$0xff]
    %v153 = vld [vmem:[#allocation6 + $0x20] sm:$0xff]
    %v154 = vld [vmem:[#allocation6 + $0x28] sm:$0xff]
    %v155 = vld [vmem:[#allocation6 + $0x30] sm:$0xff]
    %v156 = vld [vmem:[#allocation6 + $0x38] sm:$0xff]
    %v157 = vld [vmem:[%s4] sm:$0x3]
    %v159 = vlaneseq
    %v160 = vshrl.u32 %v159, 7
    %v161 = vsub.s32 0, %v160
    %v162 = vrot.slane %v157, %v161
    %v163 = vlaneseq
    %v164 = vshrl.u32 %v163, 7
    %v165 = vsub.s32 1, %v164
    %v166 = vrot.slane %v157, %v165
    %vm169 = vcmask 261120
    %v171 = vsel %vm169, %v148, 0
    %173 = vmatprep.subr.mxu0 0.0
    %174 = vmatpush1.msra.mxu0 0.0
    %175 = vmatprep.subr.mxu0 0.0
    %176 = vmatpush1.msra.mxu0 0.0
    %177 = vmatprep.subr.mxu0 0.0
    %178 = vmatpush1.msra.mxu0 0.0
    %179 = vmatprep.subr.mxu0 0.0
    %180 = vmatpush1.msra.mxu0 0.0
    %181 = vmatprep.subr.mxu0 0.0
    %182 = vmatpush1.msra.mxu0 0.0
    %183 = vmatprep.subr.mxu0 0.0
    %184 = vmatpush1.msra.mxu0 0.0
    %185 = vmatprep.subr.mxu0 0.0
    %186 = vmatpush1.msra.mxu0 0.0
    %187 = vmatprep.subr.mxu0 0.0
    %188 = vmatpush1.msra.mxu0 0.0
    %189 = vmatprep.subr.mxu0 0.0
    %190 = vmatpush1.msra.mxu0 0.0
    %191 = vmatprep.subr.mxu0 0.0
    %192 = vmatpush1.msra.mxu0 0.0
    %193 = vmatprep.subr.mxu0 0.0
    %194 = vmatpush1.msra.mxu0 0.0
    %195 = vmatprep.subr.mxu0 0.0
    %196 = vmatpush1.msra.mxu0 0.0
    %197 = vmatprep.subr.mxu0 %v156
    %198 = vmatpush1.msra.mxu0 %v155
    %199 = vmatprep.subr.mxu0 %v154
    %200 = vmatpush1.msra.mxu0 %v153
    %201 = vmatprep.subr.mxu0 %v152
    %202 = vmatpush1.msra.mxu0 %v151
    %203 = vmatprep.subr.mxu0 %v150
    %204 = vmatpush1.msra.mxu0 %v149
    %205 = vmatprep.subr.mxu0 0.0
    %206 = vmatpush2.msra.mxu0 0.0
    %207 = vmatprep.subr.mxu0 0.0
    %208 = vmatpush2.msra.mxu0 0.0
    %209 = vmatprep.subr.mxu0 0.0
    %210 = vmatpush2.msra.mxu0 0.0
    %211 = vmatprep.subr.mxu0 0.0
    %212 = vmatpush2.msra.mxu0 0.0
    %213 = vmatprep.subr.mxu0 0.0
    %214 = vmatpush2.msra.mxu0 0.0
    %215 = vmatprep.subr.mxu0 0.0
    %216 = vmatpush2.msra.mxu0 0.0
    %217 = vmatprep.subr.mxu0 0.0
    %218 = vmatpush2.msra.mxu0 0.0
    %219 = vmatprep.subr.mxu0 0.0
    %220 = vmatpush2.msra.mxu0 0.0
    %221 = vmatprep.subr.mxu0 0.0
    %222 = vmatpush2.msra.mxu0 0.0
    %223 = vmatprep.subr.mxu0 0.0
    %224 = vmatpush2.msra.mxu0 0.0
    %225 = vmatprep.subr.mxu0 0.0
    %226 = vmatpush2.msra.mxu0 0.0
    %227 = vmatprep.subr.mxu0 0.0
    %228 = vmatpush2.msra.mxu0 0.0
    %229 = vmatprep.subr.mxu0 0.0
    %230 = vmatpush2.msra.mxu0 0.0
    %231 = vmatprep.subr.mxu0 0.0
    %232 = vmatpush2.msra.mxu0 0.0
    %233 = vmatprep.subr.mxu0 0.0
    %234 = vmatpush2.msra.mxu0 0.0
    %235 = vmatprep.subr.mxu0 0.0
    %236 = vmatpush2.msra.mxu0 0.0
    %237 = vmatprep.mubr.f32.mxu0 0.0
    %238 = vmatmul.mubr.f32.gmra.mxu0 %v171
    %v239 = vpop.f32.mrf.mxu0
    %v240 = vadd.f32 %v162, %v239
    %v241 = vpop.f32.mrf.mxu0
    %v242 = vadd.f32 %v166, %v241
    %243 = vdwg.mxu0
    %v246 = vcombine.low %v240, %v242
    %v248 = vunpack.c.l.s4 1983009808
    %v249 = vunpack.c.0.s8 %v248
    %v250 = vlaneseq
    %v251 = vshrl.u32 %v250, 7
    %v252 = vsub.s32 %v249, %v251
    %v253 = vrot.slane %v246, %v252
    %255 = vst [vmem:[%s5] sm:$0xf] %v253
    // Predicated region
    $region34: #{simple_decoder_forward.6} parent=1 // pred_check
      _
    $region35: #{simple_decoder_forward.6} parent=1 // pred_check_branch
      %257 = sbr.rel (0) target = $region37
    $region36: #{simple_decoder_forward.6} parent=1 // pred_region
      _
    $region37: #{simple_decoder_forward.6} parent=1 // pred_fallthru
      _
    // Predicated region
    $region38: #{simple_decoder_forward.6} parent=1 // pred_check
      _
    $region39: #{simple_decoder_forward.6} parent=1 // pred_check_branch
      %259 = sbr.rel (0) target = $region41
    $region40: #{simple_decoder_forward.6} parent=1 // pred_region
      _
    $region41: #{simple_decoder_forward.6} parent=1 // pred_fallthru
      _
    %260 = vsyncpa [#allocation3], 1
    %261 = vsyncpa [#allocation5], 1

// kernel: simple_decoder_forward.7
$region0: #{simple_decoder_forward.7}
  #allocation0 [shape = 'u32[]', space=smem, size = 0x4, offset = 0x4, fixed_abs, tag = 'smem constant byte address 0x4 - core index']
  #allocation1 [shape = 'u32[144,128]{1,0:T(1,128)}', space=vmem, size = 0x12000, scoped, tag = 'internal scratch']
  %s0 = inlined_call_operand.vmem [shape: bf16[144,128], index: 0, kind: input, shape index: {}]
  %s1 = inlined_call_operand.vmem [shape: bf16[16,144], index: 1, kind: input, shape index: {}]
  %s2 = inlined_call_operand.vmem [shape: f32[16,1], index: 2, kind: input, shape index: {}]
  %s3 = inlined_call_operand.vmem [shape: f32[16,64], index: 3, kind: input, shape index: {}]
  %s4 = inlined_call_operand.vmem [shape: f32[16,128], index: 4, kind: output, shape index: {}]
  %s5 = sld [smem:[#allocation0]]
  $region26: #{simple_decoder_forward.7} parent=0
    _
  %s7 = ssub.s32 1, %s5
  %s8 = scalar_select 0, %s7, %s5
  // Predicated region
  $region2: #{simple_decoder_forward.7} parent=0 // pred_check
    _
  $region3: #{simple_decoder_forward.7} parent=0 // pred_check_branch
    %10 = sbr.rel (0) target = $region5
  $region4: #{simple_decoder_forward.7} parent=0 // pred_region
    _
  $region5: #{simple_decoder_forward.7} parent=0 // pred_fallthru
    _
  // Predicated region
  $region6: #{simple_decoder_forward.7} parent=0 // pred_check
    _
  $region7: #{simple_decoder_forward.7} parent=0 // pred_check_branch
    %12 = sbr.rel (0) target = $region9
  $region8: #{simple_decoder_forward.7} parent=0 // pred_region
    _
  $region9: #{simple_decoder_forward.7} parent=0 // pred_fallthru
    _
  // Predicated region
  $region10: #{simple_decoder_forward.7} parent=0 // pred_check
    _
  $region11: #{simple_decoder_forward.7} parent=0 // pred_check_branch
    %14 = sbr.rel (0) target = $region13
  $region12: #{simple_decoder_forward.7} parent=0 // pred_region
    _
  $region13: #{simple_decoder_forward.7} parent=0 // pred_fallthru
    _
  // Predicated region
  $region14: #{simple_decoder_forward.7} parent=0 // pred_check
    _
  $region15: #{simple_decoder_forward.7} parent=0 // pred_check_branch
    %16 = sbr.rel (0) target = $region17
  $region16: #{simple_decoder_forward.7} parent=0 // pred_region
    _
  $region17: #{simple_decoder_forward.7} parent=0 // pred_fallthru
    _
  %v18 = vld [vmem:[%s1] sm:$0xff]
  %v19 = vld [vmem:[%s1 + $0x8] sm:$0xff]
  %v20 = vld [vmem:[%s0] sm:$0xf]
  %v21 = vld [vmem:[%s0 + $0x4] sm:$0xf]
  %v22 = vld [vmem:[%s0 + $0x8] sm:$0xf]
  %v23 = vld [vmem:[%s0 + $0xc] sm:$0xf]
  %v24 = vld [vmem:[%s0 + $0x10] sm:$0xf]
  %v25 = vld [vmem:[%s0 + $0x14] sm:$0xf]
  %v26 = vld [vmem:[%s0 + $0x18] sm:$0xf]
  %v27 = vld [vmem:[%s0 + $0x1c] sm:$0xf]
  %v28 = vld [vmem:[%s0 + $0x20] sm:$0xf]
  %v29 = vld [vmem:[%s0 + $0x24] sm:$0xf]
  %v30 = vld [vmem:[%s0 + $0x28] sm:$0xf]
  %v31 = vld [vmem:[%s0 + $0x2c] sm:$0xf]
  %v32 = vld [vmem:[%s0 + $0x30] sm:$0xf]
  %v33 = vld [vmem:[%s0 + $0x34] sm:$0xf]
  %v34 = vld [vmem:[%s0 + $0x38] sm:$0xf]
  %v35 = vld [vmem:[%s0 + $0x3c] sm:$0xf]
  %v36 = vld [vmem:[%s0 + $0x40] sm:$0xf]
  %v37 = vld [vmem:[%s0 + $0x44] sm:$0xf]
  %v38 = vld [vmem:[%s2] sm:$0xff]
  %v39 = vld [vmem:[%s2 + $0x8] sm:$0xff]
  %41 = vset.pattern.permute.xlu0 0
  %42 = vperm.xlu0 %41, %v38
  %v43 = vpop.permute.xlu0 %42
  %46 = vset.pattern.permute.xlu0 0
  %47 = vperm.xlu0 %46, %v39
  %v48 = vpop.permute.xlu0 %47
  %v52 = vunpack.c.l.b16 %v18
  %v53 = vunpack.c.h.b16 %v18
  %v54 = vunpack.c.l.b16 %v19
  %v55 = vunpack.c.h.b16 %v19
  %v56 = vpack.c.b16 %v54, %v52
  %v57 = vpack.c.b16 %v55, %v53
  %v77 = vunpack.c.l.b16 %v20
  %v78 = vunpack.c.l.b16 %v21
  %v79 = vunpack.c.l.b16 %v22
  %v80 = vunpack.c.l.b16 %v23
  %v81 = vunpack.c.l.b16 %v24
  %v82 = vunpack.c.l.b16 %v25
  %v83 = vunpack.c.l.b16 %v26
  %v84 = vunpack.c.l.b16 %v27
  %v85 = vunpack.c.l.b16 %v28
  %v86 = vunpack.c.l.b16 %v29
  %v87 = vunpack.c.l.b16 %v30
  %v88 = vunpack.c.l.b16 %v31
  %v89 = vunpack.c.l.b16 %v32
  %v90 = vunpack.c.l.b16 %v33
  %v91 = vunpack.c.l.b16 %v34
  %v92 = vunpack.c.l.b16 %v35
  %v93 = vunpack.c.l.b16 %v36
  %v94 = vunpack.c.l.b16 %v37
  %v95 = vpack.c.b16 %v78, %v77
  %v96 = vpack.c.b16 %v80, %v79
  %v97 = vpack.c.b16 %v82, %v81
  %v98 = vpack.c.b16 %v84, %v83
  %v99 = vpack.c.b16 %v86, %v85
  %v100 = vpack.c.b16 %v88, %v87
  %v101 = vpack.c.b16 %v90, %v89
  %v102 = vpack.c.b16 %v92, %v91
  %v103 = vpack.c.b16 %v94, %v93
  %vm113 = vcmask 130048
  %v115 = vsel %vm113, %v57, 0
  %117 = vmatprep.subr.bf16.mxu0 0
  %118 = vmatpush1.bf16.msra.mxu0 %v102
  %119 = vmatprep.subr.bf16.mxu0 0
  %120 = vmatpush1.bf16.msra.mxu0 %v101
  %121 = vmatprep.subr.bf16.mxu0 0
  %122 = vmatpush1.bf16.msra.mxu0 %v100
  %123 = vmatprep.subr.bf16.mxu0 0
  %124 = vmatpush1.bf16.msra.mxu0 %v99
  %125 = vmatprep.subr.bf16.mxu0 0
  %126 = vmatpush1.bf16.msra.mxu0 %v98
  %127 = vmatprep.subr.bf16.mxu0 0
  %128 = vmatpush1.bf16.msra.mxu0 %v97
  %129 = vmatprep.subr.bf16.mxu0 0
  %130 = vmatpush1.bf16.msra.mxu0 %v96
  %131 = vmatprep.subr.bf16.mxu0 0
  %132 = vmatpush1.bf16.msra.mxu0 %v95
  %133 = vmatprep.subr.bf16.mxu0 0
  %134 = vmatpush2.bf16.msra.mxu0 0
  %135 = vmatprep.subr.bf16.mxu0 0
  %136 = vmatpush2.bf16.msra.mxu0 0
  %137 = vmatprep.subr.bf16.mxu0 0
  %138 = vmatpush2.bf16.msra.mxu0 0
  %139 = vmatprep.subr.bf16.mxu0 0
  %140 = vmatpush2.bf16.msra.mxu0 0
  %141 = vmatprep.subr.bf16.mxu0 0
  %142 = vmatpush2.bf16.msra.mxu0 0
  %143 = vmatprep.subr.bf16.mxu0 0
  %144 = vmatpush2.bf16.msra.mxu0 0
  %145 = vmatprep.subr.bf16.mxu0 0
  %146 = vmatpush2.bf16.msra.mxu0 0
  %147 = vmatprep.subr.bf16.mxu0 0
  %148 = vmatpush2.bf16.msra.mxu0 %v103
  %149 = vmatprep.mubr.bf16.mxu0 %v115
  %150 = vmatmul.mubr.bf16.gmra.mxu0 %v56
  %v151 = vpop.f32.mrf.mxu0
  %v152 = vadd.f32 %v43, %v151
  %v153 = vpop.f32.mrf.mxu0
  %v154 = vpop.f32.mrf.mxu0
  %v155 = vadd.f32 %v48, %v154
  %v156 = vpop.f32.mrf.mxu0
  %157 = vdwg.mxu0
  %v158 = vld [vmem:[%s3] sm:$0xff]
  %v159 = vld [vmem:[%s3 + $0x8] sm:$0xff]
  %162 = vrot.lane.b32.xlu0 %v158, 64
  %v163 = vpop.permute.xlu0 %162
  %164 = vrot.lane.b32.xlu0 %v159, 64
  %v165 = vpop.permute.xlu0 %164
  %vm168 = vcmask 523264
  %v169 = vsel %vm168, %v158, %v163
  %v170 = vsel %vm168, %v159, %v165
  %v171 = vadd.f32 %v152, %v169
  %v172 = vadd.f32 %v155, %v170
  %v173 = vsub.f32 0.0, %v171
  %v174 = vsub.f32 0.0, %v172
  %v175 = vmul.f32 %v173, 1.442695
  %v176 = vpow.pop %v175
  %v177 = vmul.f32 %v174, 1.442695
  %v178 = vpow.pop %v177
  %v179 = vadd.f32 %v176, 1.0
  %v180 = vadd.f32 %v178, 1.0
  %v181 = vrcp.pop %v179
  %v182 = vrcp.pop %v180
  %v183 = vmul.f32 %v171, %v181
  %v184 = vmul.f32 %v172, %v182
  %185 = vst [vmem:[%s4] sm:$0xff] %v183
  %186 = vst [vmem:[%s4 + $0x8] sm:$0xff] %v184
  // Predicated region
  $region18: #{simple_decoder_forward.7} parent=0 // pred_check
    _
  $region19: #{simple_decoder_forward.7} parent=0 // pred_check_branch
    %188 = sbr.rel (0) target = $region21
  $region20: #{simple_decoder_forward.7} parent=0 // pred_region
    _
  $region21: #{simple_decoder_forward.7} parent=0 // pred_fallthru
    _
  // Predicated region
  $region22: #{simple_decoder_forward.7} parent=0 // pred_check
    _
  $region23: #{simple_decoder_forward.7} parent=0 // pred_check_branch
    %190 = sbr.rel (0) target = $region25
  $region24: #{simple_decoder_forward.7} parent=0 // pred_region
    _
  $region25: #{simple_decoder_forward.7} parent=0 // pred_fallthru
    _

// kernel: simple_decoder_forward.9
$region0: #{simple_decoder_forward.9}
  #allocation0 [shape = 'u32[]', space=smem, size = 0x4, offset = 0x4, fixed_abs, tag = 'smem constant byte address 0x4 - core index']
  #allocation1 [shape = 'u32[144,128]{1,0:T(1,128)}', space=vmem, size = 0x12000, scoped, tag = 'internal scratch']
  %s0 = inlined_call_operand.vmem [shape: bf16[144,512], index: 0, kind: input, shape index: {}]
  %s1 = inlined_call_operand.vmem [shape: bf16[8,144], index: 1, kind: input, shape index: {}]
  %s2 = inlined_call_operand.vmem [shape: f32[8,1], index: 2, kind: input, shape index: {}]
  %s3 = inlined_call_operand.vmem [shape: f32[8,256], index: 3, kind: input, shape index: {}]
  %s4 = inlined_call_operand.vmem [shape: f32[8,512], index: 4, kind: output, shape index: {}]
  %s5 = sld [smem:[#allocation0]]
  $region26: #{simple_decoder_forward.9} parent=0
    _
  %s7 = ssub.s32 1, %s5
  %s8 = scalar_select 0, %s7, %s5
  // Predicated region
  $region2: #{simple_decoder_forward.9} parent=0 // pred_check
    _
  $region3: #{simple_decoder_forward.9} parent=0 // pred_check_branch
    %10 = sbr.rel (0) target = $region5
  $region4: #{simple_decoder_forward.9} parent=0 // pred_region
    _
  $region5: #{simple_decoder_forward.9} parent=0 // pred_fallthru
    _
  // Predicated region
  $region6: #{simple_decoder_forward.9} parent=0 // pred_check
    _
  $region7: #{simple_decoder_forward.9} parent=0 // pred_check_branch
    %12 = sbr.rel (0) target = $region9
  $region8: #{simple_decoder_forward.9} parent=0 // pred_region
    _
  $region9: #{simple_decoder_forward.9} parent=0 // pred_fallthru
    _
  // Predicated region
  $region10: #{simple_decoder_forward.9} parent=0 // pred_check
    _
  $region11: #{simple_decoder_forward.9} parent=0 // pred_check_branch
    %14 = sbr.rel (0) target = $region13
  $region12: #{simple_decoder_forward.9} parent=0 // pred_region
    _
  $region13: #{simple_decoder_forward.9} parent=0 // pred_fallthru
    _
  // Predicated region
  $region14: #{simple_decoder_forward.9} parent=0 // pred_check
    _
  $region15: #{simple_decoder_forward.9} parent=0 // pred_check_branch
    %16 = sbr.rel (0) target = $region17
  $region16: #{simple_decoder_forward.9} parent=0 // pred_region
    _
  $region17: #{simple_decoder_forward.9} parent=0 // pred_fallthru
    _
  %v18 = vld [vmem:[%s1] sm:$0xff]
  %v19 = vld [vmem:[%s0] sm:$0xff]
  %v20 = vld [vmem:[%s0 + $0x8] sm:$0xff]
  %v21 = vld [vmem:[%s0 + $0x10] sm:$0xff]
  %v22 = vld [vmem:[%s0 + $0x18] sm:$0xff]
  %v23 = vld [vmem:[%s0 + $0x20] sm:$0xff]
  %v24 = vld [vmem:[%s0 + $0x28] sm:$0xff]
  %v25 = vld [vmem:[%s0 + $0x30] sm:$0xff]
  %v26 = vld [vmem:[%s0 + $0x38] sm:$0xff]
  %v27 = vld [vmem:[%s0 + $0x40] sm:$0xff]
  %v28 = vld [vmem:[%s0 + $0x48] sm:$0xff]
  %v29 = vld [vmem:[%s0 + $0x50] sm:$0xff]
  %v30 = vld [vmem:[%s0 + $0x58] sm:$0xff]
  %v31 = vld [vmem:[%s0 + $0x60] sm:$0xff]
  %v32 = vld [vmem:[%s0 + $0x68] sm:$0xff]
  %v33 = vld [vmem:[%s0 + $0x70] sm:$0xff]
  %v34 = vld [vmem:[%s0 + $0x78] sm:$0xff]
  %v35 = vld [vmem:[%s0 + $0x80] sm:$0xff]
  %v36 = vld [vmem:[%s0 + $0x88] sm:$0xff]
  %v37 = vld [vmem:[%s0 + $0x90] sm:$0xff]
  %v38 = vld [vmem:[%s0 + $0x98] sm:$0xff]
  %v39 = vld [vmem:[%s0 + $0xa0] sm:$0xff]
  %v40 = vld [vmem:[%s0 + $0xa8] sm:$0xff]
  %v41 = vld [vmem:[%s0 + $0xb0] sm:$0xff]
  %v42 = vld [vmem:[%s0 + $0xb8] sm:$0xff]
  %v43 = vld [vmem:[%s0 + $0xc0] sm:$0xff]
  %v44 = vld [vmem:[%s0 + $0xc8] sm:$0xff]
  %v45 = vld [vmem:[%s0 + $0xd0] sm:$0xff]
  %v46 = vld [vmem:[%s0 + $0xd8] sm:$0xff]
  %v47 = vld [vmem:[%s0 + $0xe0] sm:$0xff]
  %v48 = vld [vmem:[%s0 + $0xe8] sm:$0xff]
  %v49 = vld [vmem:[%s0 + $0xf0] sm:$0xff]
  %v50 = vld [vmem:[%s0 + $0xf8] sm:$0xff]
  %v51 = vld [vmem:[%s0 + $0x100] sm:$0xff]
  %v52 = vld [vmem:[%s0 + $0x108] sm:$0xff]
  %v53 = vld [vmem:[%s0 + $0x110] sm:$0xff]
  %v54 = vld [vmem:[%s0 + $0x118] sm:$0xff]
  %v55 = vld [vmem:[%s2] sm:$0xff]
  %57 = vset.pattern.permute.xlu0 0
  %58 = vperm.xlu0 %57, %v55
  %v59 = vpop.permute.xlu0 %58
  %v62 = vunpack.c.l.b16 %v18
  %v63 = vunpack.c.h.b16 %v18
  %v64 = vpack.c.b16 %v62, %v62
  %v65 = vpack.c.b16 %v63, %v63
  %v103 = vunpack.c.l.b16 %v19
  %v104 = vunpack.c.h.b16 %v19
  %v105 = vunpack.c.l.b16 %v20
  %v106 = vunpack.c.h.b16 %v20
  %v107 = vunpack.c.l.b16 %v21
  %v108 = vunpack.c.h.b16 %v21
  %v109 = vunpack.c.l.b16 %v22
  %v110 = vunpack.c.h.b16 %v22
  %v111 = vunpack.c.l.b16 %v23
  %v112 = vunpack.c.h.b16 %v23
  %v113 = vunpack.c.l.b16 %v24
  %v114 = vunpack.c.h.b16 %v24
  %v115 = vunpack.c.l.b16 %v25
  %v116 = vunpack.c.h.b16 %v25
  %v117 = vunpack.c.l.b16 %v26
  %v118 = vunpack.c.h.b16 %v26
  %v119 = vunpack.c.l.b16 %v27
  %v120 = vunpack.c.h.b16 %v27
  %v121 = vunpack.c.l.b16 %v28
  %v122 = vunpack.c.h.b16 %v28
  %v123 = vunpack.c.l.b16 %v29
  %v124 = vunpack.c.h.b16 %v29
  %v125 = vunpack.c.l.b16 %v30
  %v126 = vunpack.c.h.b16 %v30
  %v127 = vunpack.c.l.b16 %v31
  %v128 = vunpack.c.h.b16 %v31
  %v129 = vunpack.c.l.b16 %v32
  %v130 = vunpack.c.h.b16 %v32
  %v131 = vunpack.c.l.b16 %v33
  %v132 = vunpack.c.h.b16 %v33
  %v133 = vunpack.c.l.b16 %v34
  %v134 = vunpack.c.h.b16 %v34
  %v135 = vunpack.c.l.b16 %v35
  %v136 = vunpack.c.h.b16 %v35
  %v137 = vunpack.c.l.b16 %v36
  %v138 = vunpack.c.h.b16 %v36
  %v139 = vunpack.c.l.b16 %v37
  %v140 = vunpack.c.h.b16 %v37
  %v141 = vunpack.c.l.b16 %v38
  %v142 = vunpack.c.h.b16 %v38
  %v143 = vunpack.c.l.b16 %v39
  %v144 = vunpack.c.h.b16 %v39
  %v145 = vunpack.c.l.b16 %v40
  %v146 = vunpack.c.h.b16 %v40
  %v147 = vunpack.c.l.b16 %v41
  %v148 = vunpack.c.h.b16 %v41
  %v149 = vunpack.c.l.b16 %v42
  %v150 = vunpack.c.h.b16 %v42
  %v151 = vunpack.c.l.b16 %v43
  %v152 = vunpack.c.h.b16 %v43
  %v153 = vunpack.c.l.b16 %v44
  %v154 = vunpack.c.h.b16 %v44
  %v155 = vunpack.c.l.b16 %v45
  %v156 = vunpack.c.h.b16 %v45
  %v157 = vunpack.c.l.b16 %v46
  %v158 = vunpack.c.h.b16 %v46
  %v159 = vunpack.c.l.b16 %v47
  %v160 = vunpack.c.h.b16 %v47
  %v161 = vunpack.c.l.b16 %v48
  %v162 = vunpack.c.h.b16 %v48
  %v163 = vunpack.c.l.b16 %v49
  %v164 = vunpack.c.h.b16 %v49
  %v165 = vunpack.c.l.b16 %v50
  %v166 = vunpack.c.h.b16 %v50
  %v167 = vunpack.c.l.b16 %v51
  %v168 = vunpack.c.h.b16 %v51
  %v169 = vunpack.c.l.b16 %v52
  %v170 = vunpack.c.h.b16 %v52
  %v171 = vunpack.c.l.b16 %v53
  %v172 = vunpack.c.h.b16 %v53
  %v173 = vunpack.c.l.b16 %v54
  %v174 = vunpack.c.h.b16 %v54
  %v175 = vpack.c.b16 %v107, %v103
  %v176 = vpack.c.b16 %v108, %v104
  %v177 = vpack.c.b16 %v109, %v105
  %v178 = vpack.c.b16 %v110, %v106
  %v179 = vpack.c.b16 %v115, %v111
  %v180 = vpack.c.b16 %v116, %v112
  %v181 = vpack.c.b16 %v117, %v113
  %v182 = vpack.c.b16 %v118, %v114
  %v183 = vpack.c.b16 %v123, %v119
  %v184 = vpack.c.b16 %v124, %v120
  %v185 = vpack.c.b16 %v125, %v121
  %v186 = vpack.c.b16 %v126, %v122
  %v187 = vpack.c.b16 %v131, %v127
  %v188 = vpack.c.b16 %v132, %v128
  %v189 = vpack.c.b16 %v133, %v129
  %v190 = vpack.c.b16 %v134, %v130
  %v191 = vpack.c.b16 %v139, %v135
  %v192 = vpack.c.b16 %v140, %v136
  %v193 = vpack.c.b16 %v141, %v137
  %v194 = vpack.c.b16 %v142, %v138
  %v195 = vpack.c.b16 %v147, %v143
  %v196 = vpack.c.b16 %v148, %v144
  %v197 = vpack.c.b16 %v149, %v145
  %v198 = vpack.c.b16 %v150, %v146
  %v199 = vpack.c.b16 %v155, %v151
  %v200 = vpack.c.b16 %v156, %v152
  %v201 = vpack.c.b16 %v157, %v153
  %v202 = vpack.c.b16 %v158, %v154
  %v203 = vpack.c.b16 %v163, %v159
  %v204 = vpack.c.b16 %v164, %v160
  %v205 = vpack.c.b16 %v165, %v161
  %v206 = vpack.c.b16 %v166, %v162
  %v207 = vpack.c.b16 %v171, %v167
  %v208 = vpack.c.b16 %v172, %v168
  %v209 = vpack.c.b16 %v173, %v169
  %v210 = vpack.c.b16 %v174, %v170
  %vm247 = vcmask 130048
  %v249 = vsel %vm247, %v65, 0
  %251 = vmatprep.subr.bf16.mxu0 %v204
  %252 = vmatpush1.bf16.msra.mxu0 %v203
  %253 = vmatprep.subr.bf16.mxu0 %v200
  %254 = vmatpush1.bf16.msra.mxu0 %v199
  %255 = vmatprep.subr.bf16.mxu0 %v196
  %256 = vmatpush1.bf16.msra.mxu0 %v195
  %257 = vmatprep.subr.bf16.mxu0 %v192
  %258 = vmatpush1.bf16.msra.mxu0 %v191
  %259 = vmatprep.subr.bf16.mxu0 %v188
  %260 = vmatpush1.bf16.msra.mxu0 %v187
  %261 = vmatprep.subr.bf16.mxu0 %v184
  %262 = vmatpush1.bf16.msra.mxu0 %v183
  %263 = vmatprep.subr.bf16.mxu0 %v180
  %264 = vmatpush1.bf16.msra.mxu0 %v179
  %265 = vmatprep.subr.bf16.mxu0 %v176
  %266 = vmatpush1.bf16.msra.mxu0 %v175
  %267 = vmatprep.subr.bf16.mxu0 0
  %268 = vmatpush2.bf16.msra.mxu0 0
  %269 = vmatprep.subr.bf16.mxu0 0
  %270 = vmatpush2.bf16.msra.mxu0 0
  %271 = vmatprep.subr.bf16.mxu0 0
  %272 = vmatpush2.bf16.msra.mxu0 0
  %273 = vmatprep.subr.bf16.mxu0 0
  %274 = vmatpush2.bf16.msra.mxu0 0
  %275 = vmatprep.subr.bf16.mxu0 0
  %276 = vmatpush2.bf16.msra.mxu0 0
  %277 = vmatprep.subr.bf16.mxu0 0
  %278 = vmatpush2.bf16.msra.mxu0 0
  %279 = vmatprep.subr.bf16.mxu0 0
  %280 = vmatpush2.bf16.msra.mxu0 0
  %281 = vmatprep.subr.bf16.mxu0 %v208
  %282 = vmatpush2.bf16.msra.mxu0 %v207
  %283 = vmatprep.mubr.bf16.mxu0 %v249
  %284 = vmatmul.mubr.bf16.gmra.mxu0 %v64
  %v285 = vpop.f32.mrf.mxu0
  %v286 = vadd.f32 %v59, %v285
  %v287 = vpop.f32.mrf.mxu0
  %v288 = vadd.f32 %v59, %v287
  %v289 = vpop.f32.mrf.mxu0
  %v290 = vpop.f32.mrf.mxu0
  %291 = vdwg.mxu0
  %292 = vmatprep.subr.bf16.mxu0 %v206
  %293 = vmatpush1.bf16.msra.mxu0 %v205
  %294 = vmatprep.subr.bf16.mxu0 %v202
  %295 = vmatpush1.bf16.msra.mxu0 %v201
  %296 = vmatprep.subr.bf16.mxu0 %v198
  %297 = vmatpush1.bf16.msra.mxu0 %v197
  %298 = vmatprep.subr.bf16.mxu0 %v194
  %299 = vmatpush1.bf16.msra.mxu0 %v193
  %300 = vmatprep.subr.bf16.mxu0 %v190
  %301 = vmatpush1.bf16.msra.mxu0 %v189
  %302 = vmatprep.subr.bf16.mxu0 %v186
  %303 = vmatpush1.bf16.msra.mxu0 %v185
  %304 = vmatprep.subr.bf16.mxu0 %v182
  %305 = vmatpush1.bf16.msra.mxu0 %v181
  %306 = vmatprep.subr.bf16.mxu0 %v178
  %307 = vmatpush1.bf16.msra.mxu0 %v177
  %308 = vmatprep.subr.bf16.mxu0 0
  %309 = vmatpush2.bf16.msra.mxu0 0
  %310 = vmatprep.subr.bf16.mxu0 0
  %311 = vmatpush2.bf16.msra.mxu0 0
  %312 = vmatprep.subr.bf16.mxu0 0
  %313 = vmatpush2.bf16.msra.mxu0 0
  %314 = vmatprep.subr.bf16.mxu0 0
  %315 = vmatpush2.bf16.msra.mxu0 0
  %316 = vmatprep.subr.bf16.mxu0 0
  %317 = vmatpush2.bf16.msra.mxu0 0
  %318 = vmatprep.subr.bf16.mxu0 0
  %319 = vmatpush2.bf16.msra.mxu0 0
  %320 = vmatprep.subr.bf16.mxu0 0
  %321 = vmatpush2.bf16.msra.mxu0 0
  %322 = vmatprep.subr.bf16.mxu0 %v210
  %323 = vmatpush2.bf16.msra.mxu0 %v209
  %324 = vmatprep.mubr.bf16.mxu0 %v249
  %325 = vmatmul.mubr.bf16.gmra.mxu0 %v64
  %v326 = vpop.f32.mrf.mxu0
  %v327 = vadd.f32 %v59, %v326
  %v328 = vpop.f32.mrf.mxu0
  %v329 = vadd.f32 %v59, %v328
  %v330 = vpop.f32.mrf.mxu0
  %v331 = vpop.f32.mrf.mxu0
  %332 = vdwg.mxu0
  %v333 = vld [vmem:[%s3] sm:$0xff]
  %v334 = vld [vmem:[%s3 + $0x8] sm:$0xff]
  %v335 = vadd.f32 %v286, %v333
  %v336 = vadd.f32 %v288, %v334
  %v337 = vadd.f32 %v327, %v333
  %v338 = vadd.f32 %v329, %v334
  %v339 = vsub.f32 0.0, %v335
  %v340 = vsub.f32 0.0, %v336
  %v341 = vsub.f32 0.0, %v337
  %v342 = vsub.f32 0.0, %v338
  %v343 = vmul.f32 %v339, 1.442695
  %v344 = vpow.pop %v343
  %v345 = vmul.f32 %v340, 1.442695
  %v346 = vpow.pop %v345
  %v347 = vmul.f32 %v341, 1.442695
  %v348 = vpow.pop %v347
  %v349 = vmul.f32 %v342, 1.442695
  %v350 = vpow.pop %v349
  %v351 = vadd.f32 %v344, 1.0
  %v352 = vadd.f32 %v346, 1.0
  %v353 = vadd.f32 %v348, 1.0
  %v354 = vadd.f32 %v350, 1.0
  %v355 = vrcp.pop %v351
  %v356 = vrcp.pop %v352
  %v357 = vrcp.pop %v353
  %v358 = vrcp.pop %v354
  %v359 = vmul.f32 %v335, %v355
  %v360 = vmul.f32 %v336, %v356
  %v361 = vmul.f32 %v337, %v357
  %v362 = vmul.f32 %v338, %v358
  %363 = vst [vmem:[%s4] sm:$0xff] %v359
  %364 = vst [vmem:[%s4 + $0x8] sm:$0xff] %v360
  %365 = vst [vmem:[%s4 + $0x10] sm:$0xff] %v361
  %366 = vst [vmem:[%s4 + $0x18] sm:$0xff] %v362
  // Predicated region
  $region18: #{simple_decoder_forward.9} parent=0 // pred_check
    _
  $region19: #{simple_decoder_forward.9} parent=0 // pred_check_branch
    %368 = sbr.rel (0) target = $region21
  $region20: #{simple_decoder_forward.9} parent=0 // pred_region
    _
  $region21: #{simple_decoder_forward.9} parent=0 // pred_fallthru
    _
  // Predicated region
  $region22: #{simple_decoder_forward.9} parent=0 // pred_check
    _
  $region23: #{simple_decoder_forward.9} parent=0 // pred_check_branch
    %370 = sbr.rel (0) target = $region25
  $region24: #{simple_decoder_forward.9} parent=0 // pred_region
    _
  $region25: #{simple_decoder_forward.9} parent=0 // pred_fallthru
    _

// kernel: simple_decoder_forward.10
$region0: #{simple_decoder_forward.10}
  #allocation0 [shape = 'u32[]', space=smem, size = 0x4, offset = 0x4, fixed_abs, tag = 'smem constant byte address 0x4 - core index']
  #allocation1 [shape = 'u32[144,128]{1,0:T(1,128)}', space=vmem, size = 0x12000, scoped, tag = 'internal scratch']
  %s0 = inlined_call_operand.vmem [shape: bf16[72,512], index: 0, kind: input, shape index: {}]
  %s1 = inlined_call_operand.vmem [shape: bf16[8,72], index: 1, kind: input, shape index: {}]
  %s2 = inlined_call_operand.vmem [shape: f32[8,1], index: 2, kind: input, shape index: {}]
  %s3 = inlined_call_operand.vmem [shape: f32[8,256], index: 3, kind: input, shape index: {}]
  %s4 = inlined_call_operand.vmem [shape: f32[8,512], index: 4, kind: output, shape index: {}]
  %s5 = sld [smem:[#allocation0]]
  $region26: #{simple_decoder_forward.10} parent=0
    _
  %s7 = ssub.s32 1, %s5
  %s8 = scalar_select 0, %s7, %s5
  // Predicated region
  $region2: #{simple_decoder_forward.10} parent=0 // pred_check
    _
  $region3: #{simple_decoder_forward.10} parent=0 // pred_check_branch
    %10 = sbr.rel (0) target = $region5
  $region4: #{simple_decoder_forward.10} parent=0 // pred_region
    _
  $region5: #{simple_decoder_forward.10} parent=0 // pred_fallthru
    _
  // Predicated region
  $region6: #{simple_decoder_forward.10} parent=0 // pred_check
    _
  $region7: #{simple_decoder_forward.10} parent=0 // pred_check_branch
    %12 = sbr.rel (0) target = $region9
  $region8: #{simple_decoder_forward.10} parent=0 // pred_region
    _
  $region9: #{simple_decoder_forward.10} parent=0 // pred_fallthru
    _
  // Predicated region
  $region10: #{simple_decoder_forward.10} parent=0 // pred_check
    _
  $region11: #{simple_decoder_forward.10} parent=0 // pred_check_branch
    %14 = sbr.rel (0) target = $region13
  $region12: #{simple_decoder_forward.10} parent=0 // pred_region
    _
  $region13: #{simple_decoder_forward.10} parent=0 // pred_fallthru
    _
  // Predicated region
  $region14: #{simple_decoder_forward.10} parent=0 // pred_check
    _
  $region15: #{simple_decoder_forward.10} parent=0 // pred_check_branch
    %16 = sbr.rel (0) target = $region17
  $region16: #{simple_decoder_forward.10} parent=0 // pred_region
    _
  $region17: #{simple_decoder_forward.10} parent=0 // pred_fallthru
    _
  %v18 = vld [vmem:[%s1] sm:$0xf]
  %v19 = vld [vmem:[%s0] sm:$0xff]
  %v20 = vld [vmem:[%s0 + $0x8] sm:$0xff]
  %v21 = vld [vmem:[%s0 + $0x10] sm:$0xff]
  %v22 = vld [vmem:[%s0 + $0x18] sm:$0xff]
  %v23 = vld [vmem:[%s0 + $0x20] sm:$0xff]
  %v24 = vld [vmem:[%s0 + $0x28] sm:$0xff]
  %v25 = vld [vmem:[%s0 + $0x30] sm:$0xff]
  %v26 = vld [vmem:[%s0 + $0x38] sm:$0xff]
  %v27 = vld [vmem:[%s0 + $0x40] sm:$0xff]
  %v28 = vld [vmem:[%s0 + $0x48] sm:$0xff]
  %v29 = vld [vmem:[%s0 + $0x50] sm:$0xff]
  %v30 = vld [vmem:[%s0 + $0x58] sm:$0xff]
  %v31 = vld [vmem:[%s0 + $0x60] sm:$0xff]
  %v32 = vld [vmem:[%s0 + $0x68] sm:$0xff]
  %v33 = vld [vmem:[%s0 + $0x70] sm:$0xff]
  %v34 = vld [vmem:[%s0 + $0x78] sm:$0xff]
  %v35 = vld [vmem:[%s0 + $0x80] sm:$0xff]
  %v36 = vld [vmem:[%s0 + $0x88] sm:$0xff]
  %v37 = vld [vmem:[%s2] sm:$0xff]
  %39 = vset.pattern.permute.xlu0 0
  %40 = vperm.xlu0 %39, %v37
  %v41 = vpop.permute.xlu0 %40
  %v61 = vunpack.c.l.b16 %v19
  %v62 = vunpack.c.h.b16 %v19
  %v63 = vunpack.c.l.b16 %v20
  %v64 = vunpack.c.h.b16 %v20
  %v65 = vunpack.c.l.b16 %v21
  %v66 = vunpack.c.h.b16 %v21
  %v67 = vunpack.c.l.b16 %v22
  %v68 = vunpack.c.h.b16 %v22
  %v69 = vunpack.c.l.b16 %v23
  %v70 = vunpack.c.h.b16 %v23
  %v71 = vunpack.c.l.b16 %v24
  %v72 = vunpack.c.h.b16 %v24
  %v73 = vunpack.c.l.b16 %v25
  %v74 = vunpack.c.h.b16 %v25
  %v75 = vunpack.c.l.b16 %v26
  %v76 = vunpack.c.h.b16 %v26
  %v77 = vunpack.c.l.b16 %v27
  %v78 = vunpack.c.h.b16 %v27
  %v79 = vunpack.c.l.b16 %v28
  %v80 = vunpack.c.h.b16 %v28
  %v81 = vunpack.c.l.b16 %v29
  %v82 = vunpack.c.h.b16 %v29
  %v83 = vunpack.c.l.b16 %v30
  %v84 = vunpack.c.h.b16 %v30
  %v85 = vunpack.c.l.b16 %v31
  %v86 = vunpack.c.h.b16 %v31
  %v87 = vunpack.c.l.b16 %v32
  %v88 = vunpack.c.h.b16 %v32
  %v89 = vunpack.c.l.b16 %v33
  %v90 = vunpack.c.h.b16 %v33
  %v91 = vunpack.c.l.b16 %v34
  %v92 = vunpack.c.h.b16 %v34
  %v93 = vunpack.c.l.b16 %v35
  %v94 = vunpack.c.h.b16 %v35
  %v95 = vunpack.c.l.b16 %v36
  %v96 = vunpack.c.h.b16 %v36
  %v97 = vpack.c.b16 %v65, %v61
  %v98 = vpack.c.b16 %v66, %v62
  %v99 = vpack.c.b16 %v67, %v63
  %v100 = vpack.c.b16 %v68, %v64
  %v101 = vpack.c.b16 %v73, %v69
  %v102 = vpack.c.b16 %v74, %v70
  %v103 = vpack.c.b16 %v75, %v71
  %v104 = vpack.c.b16 %v76, %v72
  %v105 = vpack.c.b16 %v81, %v77
  %v106 = vpack.c.b16 %v82, %v78
  %v107 = vpack.c.b16 %v83, %v79
  %v108 = vpack.c.b16 %v84, %v80
  %v109 = vpack.c.b16 %v89, %v85
  %v110 = vpack.c.b16 %v90, %v86
  %v111 = vpack.c.b16 %v91, %v87
  %v112 = vpack.c.b16 %v92, %v88
  %v113 = vpack.c.b16 %v93, %v93
  %v114 = vpack.c.b16 %v94, %v94
  %v115 = vpack.c.b16 %v95, %v95
  %v116 = vpack.c.b16 %v96, %v96
  %vm133 = vcmask 588800
  %v135 = vsel %vm133, %v18, 0
  %vm137 = vcmask 1043456
  %v139 = vsel %vm137, %v113, 0
  %v142 = vsel %vm137, %v114, 0
  %v145 = vsel %vm137, %v115, 0
  %v148 = vsel %vm137, %v116, 0
  %150 = vmatprep.subr.bf16.mxu0 0
  %151 = vmatpush1.bf16.msra.mxu0 0
  %152 = vmatprep.subr.bf16.mxu0 0
  %153 = vmatpush1.bf16.msra.mxu0 0
  %154 = vmatprep.subr.bf16.mxu0 0
  %155 = vmatpush1.bf16.msra.mxu0 0
  %156 = vmatprep.subr.bf16.mxu0 %v142
  %157 = vmatpush1.bf16.msra.mxu0 %v139
  %158 = vmatprep.subr.bf16.mxu0 %v110
  %159 = vmatpush1.bf16.msra.mxu0 %v109
  %160 = vmatprep.subr.bf16.mxu0 %v106
  %161 = vmatpush1.bf16.msra.mxu0 %v105
  %162 = vmatprep.subr.bf16.mxu0 %v102
  %163 = vmatpush1.bf16.msra.mxu0 %v101
  %164 = vmatprep.subr.bf16.mxu0 %v98
  %165 = vmatpush1.bf16.msra.mxu0 %v97
  %166 = vmatprep.subr.bf16.mxu0 0
  %167 = vmatpush2.bf16.msra.mxu0 0
  %168 = vmatprep.subr.bf16.mxu0 0
  %169 = vmatpush2.bf16.msra.mxu0 0
  %170 = vmatprep.subr.bf16.mxu0 0
  %171 = vmatpush2.bf16.msra.mxu0 0
  %172 = vmatprep.subr.bf16.mxu0 0
  %173 = vmatpush2.bf16.msra.mxu0 0
  %174 = vmatprep.subr.bf16.mxu0 0
  %175 = vmatpush2.bf16.msra.mxu0 0
  %176 = vmatprep.subr.bf16.mxu0 0
  %177 = vmatpush2.bf16.msra.mxu0 0
  %178 = vmatprep.subr.bf16.mxu0 0
  %179 = vmatpush2.bf16.msra.mxu0 0
  %180 = vmatprep.subr.bf16.mxu0 0
  %181 = vmatpush2.bf16.msra.mxu0 0
  %182 = vmatprep.mubr.bf16.mxu0 0
  %183 = vmatmul.mubr.bf16.gmra.mxu0 %v135
  %v184 = vpop.f32.mrf.mxu0
  %v185 = vadd.f32 %v41, %v184
  %v186 = vpop.f32.mrf.mxu0
  %v187 = vadd.f32 %v41, %v186
  %v188 = vpop.f32.mrf.mxu0
  %v189 = vpop.f32.mrf.mxu0
  %190 = vdwg.mxu0
  %191 = vmatprep.subr.bf16.mxu0 0
  %192 = vmatpush1.bf16.msra.mxu0 0
  %193 = vmatprep.subr.bf16.mxu0 0
  %194 = vmatpush1.bf16.msra.mxu0 0
  %195 = vmatprep.subr.bf16.mxu0 0
  %196 = vmatpush1.bf16.msra.mxu0 0
  %197 = vmatprep.subr.bf16.mxu0 %v148
  %198 = vmatpush1.bf16.msra.mxu0 %v145
  %199 = vmatprep.subr.bf16.mxu0 %v112
  %200 = vmatpush1.bf16.msra.mxu0 %v111
  %201 = vmatprep.subr.bf16.mxu0 %v108
  %202 = vmatpush1.bf16.msra.mxu0 %v107
  %203 = vmatprep.subr.bf16.mxu0 %v104
  %204 = vmatpush1.bf16.msra.mxu0 %v103
  %205 = vmatprep.subr.bf16.mxu0 %v100
  %206 = vmatpush1.bf16.msra.mxu0 %v99
  %207 = vmatprep.subr.bf16.mxu0 0
  %208 = vmatpush2.bf16.msra.mxu0 0
  %209 = vmatprep.subr.bf16.mxu0 0
  %210 = vmatpush2.bf16.msra.mxu0 0
  %211 = vmatprep.subr.bf16.mxu0 0
  %212 = vmatpush2.bf16.msra.mxu0 0
  %213 = vmatprep.subr.bf16.mxu0 0
  %214 = vmatpush2.bf16.msra.mxu0 0
  %215 = vmatprep.subr.bf16.mxu0 0
  %216 = vmatpush2.bf16.msra.mxu0 0
  %217 = vmatprep.subr.bf16.mxu0 0
  %218 = vmatpush2.bf16.msra.mxu0 0
  %219 = vmatprep.subr.bf16.mxu0 0
  %220 = vmatpush2.bf16.msra.mxu0 0
  %221 = vmatprep.subr.bf16.mxu0 0
  %222 = vmatpush2.bf16.msra.mxu0 0
  %223 = vmatprep.mubr.bf16.mxu0 0
  %224 = vmatmul.mubr.bf16.gmra.mxu0 %v135
  %v225 = vpop.f32.mrf.mxu0
  %v226 = vadd.f32 %v41, %v225
  %v227 = vpop.f32.mrf.mxu0
  %v228 = vadd.f32 %v41, %v227
  %v229 = vpop.f32.mrf.mxu0
  %v230 = vpop.f32.mrf.mxu0
  %231 = vdwg.mxu0
  %v232 = vld [vmem:[%s3] sm:$0xff]
  %v233 = vld [vmem:[%s3 + $0x8] sm:$0xff]
  %v234 = vadd.f32 %v185, %v232
  %v235 = vadd.f32 %v187, %v233
  %v236 = vadd.f32 %v226, %v232
  %v237 = vadd.f32 %v228, %v233
  %v238 = vsub.f32 0.0, %v234
  %v239 = vsub.f32 0.0, %v235
  %v240 = vsub.f32 0.0, %v236
  %v241 = vsub.f32 0.0, %v237
  %v242 = vmul.f32 %v238, 1.442695
  %v243 = vpow.pop %v242
  %v244 = vmul.f32 %v239, 1.442695
  %v245 = vpow.pop %v244
  %v246 = vmul.f32 %v240, 1.442695
  %v247 = vpow.pop %v246
  %v248 = vmul.f32 %v241, 1.442695
  %v249 = vpow.pop %v248
  %v250 = vadd.f32 %v243, 1.0
  %v251 = vadd.f32 %v245, 1.0
  %v252 = vadd.f32 %v247, 1.0
  %v253 = vadd.f32 %v249, 1.0
  %v254 = vrcp.pop %v250
  %v255 = vrcp.pop %v251
  %v256 = vrcp.pop %v252
  %v257 = vrcp.pop %v253
  %v258 = vmul.f32 %v234, %v254
  %v259 = vmul.f32 %v235, %v255
  %v260 = vmul.f32 %v236, %v256
  %v261 = vmul.f32 %v237, %v257
  %262 = vst [vmem:[%s4] sm:$0xff] %v258
  %263 = vst [vmem:[%s4 + $0x8] sm:$0xff] %v259
  %264 = vst [vmem:[%s4 + $0x10] sm:$0xff] %v260
  %265 = vst [vmem:[%s4 + $0x18] sm:$0xff] %v261
  // Predicated region
  $region18: #{simple_decoder_forward.10} parent=0 // pred_check
    _
  $region19: #{simple_decoder_forward.10} parent=0 // pred_check_branch
    %267 = sbr.rel (0) target = $region21
  $region20: #{simple_decoder_forward.10} parent=0 // pred_region
    _
  $region21: #{simple_decoder_forward.10} parent=0 // pred_fallthru
    _
  // Predicated region
  $region22: #{simple_decoder_forward.10} parent=0 // pred_check
    _
  $region23: #{simple_decoder_forward.10} parent=0 // pred_check_branch
    %269 = sbr.rel (0) target = $region25
  $region24: #{simple_decoder_forward.10} parent=0 // pred_region
    _
  $region25: #{simple_decoder_forward.10} parent=0 // pred_fallthru
    _

// kernel: simple_decoder_forward.11
$region0: #{simple_decoder_forward.11}
  #allocation0 [shape = 'u32[]', space=smem, size = 0x4, offset = 0x4, fixed_abs, tag = 'smem constant byte address 0x4 - core index']
  #allocation1 [shape = 'u32[144,128]{1,0:T(1,128)}', space=vmem, size = 0x12000, scoped, tag = 'internal scratch']
  %s0 = inlined_call_operand.vmem [shape: bf16[72,2048], index: 0, kind: input, shape index: {}]
  %s1 = inlined_call_operand.vmem [shape: bf16[3,72], index: 1, kind: input, shape index: {}]
  %s2 = inlined_call_operand.vmem [shape: f32[3,1], index: 2, kind: input, shape index: {}]
  %s3 = inlined_call_operand.vmem [shape: f32[3,2048], index: 3, kind: output, shape index: {}]
  %s4 = sld [smem:[#allocation0]]
  $region68: #{simple_decoder_forward.11} parent=0
    _
  %s6 = ssub.s32 1, %s4
  %s7 = scalar_select 0, %s6, %s4
  $region1: #{simple_decoder_forward.11} parent=0
    #allocation2 [shape = 'u8[147456]{0}', space=vmem, size = 0x24000, scoped, tag = 'input window, operand 0']
    loop: start=0, step=1, limit=6
    $region2: #{simple_decoder_forward.11} parent=1 // loop_pre_header
      _
    $region3: #{simple_decoder_forward.11} parent=1 // loop_header
      %s9 = sphi 0, %s13
      %p10 = scmp.ge.s32.totalorder %s9, 6
      %s19 = sphi 0, %s21
      %s22 = sphi 0, %s19
      %s23 = sphi 0, %s22
      %s39 = sphi 0, %s23
      %s43 = sphi 0, %s43
      %s45 = sphi 0, %s43
      %s46 = sphi 0, %s45
      %s60 = sphi 0, %s46
      %s64 = sphi 0, %s64
      %s66 = sphi 0, %s64
      %s67 = sphi 0, %s66
      %s81 = sphi 0, %s67
      %s87 = sphi 0, %s89
      %s90 = sphi 0, %s87
      %s91 = sphi 0, %s90
      %s107 = sphi 0, %s91
    $region4: #{simple_decoder_forward.11} parent=1 // loop_header_branch
      %12 = sbr.rel (%p10) target = $region8
    $region5: #{simple_decoder_forward.11} parent=1 // loop_body
      %s14 = ssub.s32 %s9, 1
      %s15 = ssub.s32 %s9, 2
      %s16 = sadd.s32 %s9, 1
      %s17 = ssub.s32 %s9, %s16
      %p18 = scmp.eq.s32.totalorder %s17, 0
      %s20 = sadd.s32 %s19, 1
      %s21 = scalar_select %p18, %s19, %s20
      %p24 = pneg %p18
      %p25 = scmp.eq.s32.totalorder %s9, 3
      %p26 = por %p24, %p25
      %p27 = scmp.ne.s32.totalorder %s19, %s22
      %p28 = scmp.eq.s32.totalorder %s9, 0
      %p29 = por %p27, %p28
      %p30 = scmp.ne.s32.totalorder %s19, %s22
      %p31 = scmp.eq.s32.totalorder %s14, 3
      %p32 = por %p30, %p31
      %p33 = scmp.ne.s32.totalorder %s22, %s23
      %p34 = scmp.eq.s32.totalorder %s14, 0
      %p35 = por %p33, %p34
      %p36 = scmp.ne.s32.totalorder %s22, %s23
      %p37 = scmp.eq.s32.totalorder %s15, 3
      %p38 = por %p36, %p37
      %p40 = scmp.ne.s32.totalorder %s23, %s39
      %p41 = scmp.eq.s32.totalorder %s15, 0
      %p42 = por %p40, %p41
      %s44 = sadd.s32 %s43, 1
      %p47 = scmp.eq.s32.totalorder %s9, 3
      %p48 = scmp.ne.s32.totalorder %s43, %s45
      %p49 = scmp.eq.s32.totalorder %s9, 0
      %p50 = por %p48, %p49
      %p51 = scmp.ne.s32.totalorder %s43, %s45
      %p52 = scmp.eq.s32.totalorder %s14, 3
      %p53 = por %p51, %p52
      %p54 = scmp.ne.s32.totalorder %s45, %s46
      %p55 = scmp.eq.s32.totalorder %s14, 0
      %p56 = por %p54, %p55
      %p57 = scmp.ne.s32.totalorder %s45, %s46
      %p58 = scmp.eq.s32.totalorder %s15, 3
      %p59 = por %p57, %p58
      %p61 = scmp.ne.s32.totalorder %s46, %s60
      %p62 = scmp.eq.s32.totalorder %s15, 0
      %p63 = por %p61, %p62
      %s65 = sadd.s32 %s64, 1
      %p68 = scmp.eq.s32.totalorder %s9, 3
      %p69 = scmp.ne.s32.totalorder %s64, %s66
      %p70 = scmp.eq.s32.totalorder %s9, 0
      %p71 = por %p69, %p70
      %p72 = scmp.ne.s32.totalorder %s64, %s66
      %p73 = scmp.eq.s32.totalorder %s14, 3
      %p74 = por %p72, %p73
      %p75 = scmp.ne.s32.totalorder %s66, %s67
      %p76 = scmp.eq.s32.totalorder %s14, 0
      %p77 = por %p75, %p76
      %p78 = scmp.ne.s32.totalorder %s66, %s67
      %p79 = scmp.eq.s32.totalorder %s15, 3
      %p80 = por %p78, %p79
      %p82 = scmp.ne.s32.totalorder %s67, %s81
      %p83 = scmp.eq.s32.totalorder %s15, 0
      %p84 = por %p82, %p83
      %s85 = ssub.s32 %s9, %s16
      %p86 = scmp.eq.s32.totalorder %s85, 0
      %s88 = sadd.s32 %s87, 1
      %s89 = scalar_select %p86, %s87, %s88
      %p92 = pneg %p86
      %p93 = scmp.eq.s32.totalorder %s9, 3
      %p94 = por %p92, %p93
      %p95 = scmp.ne.s32.totalorder %s87, %s90
      %p96 = scmp.eq.s32.totalorder %s9, 0
      %p97 = por %p95, %p96
      %p98 = scmp.ne.s32.totalorder %s87, %s90
      %p99 = scmp.eq.s32.totalorder %s14, 3
      %p100 = por %p98, %p99
      %p101 = scmp.ne.s32.totalorder %s90, %s91
      %p102 = scmp.eq.s32.totalorder %s14, 0
      %p103 = por %p101, %p102
      %p104 = scmp.ne.s32.totalorder %s90, %s91
      %p105 = scmp.eq.s32.totalorder %s15, 3
      %p106 = por %p104, %p105
      %p108 = scmp.ne.s32.totalorder %s91, %s107
      %p109 = scmp.eq.s32.totalorder %s15, 0
      %p110 = por %p108, %p109
      %p111 = scmp.le.s32.totalorder 1, %s9
      %p112 = scmp.lt.s32.totalorder %s9, 5
      %p113 = pnand %p111, %p112
      %p114 = pneg %p113
      // Predicated region
      $region9: #{simple_decoder_forward.11} parent=5 // pred_check
        _
      $region10: #{simple_decoder_forward.11} parent=5 // pred_check_branch
        %116 = sbr.rel (%p113) target = $region12
      $region11: #{simple_decoder_forward.11} parent=5 // pred_region
        %s117 = ssub.s32 %s9, 1
        // Predicated region
        $region13: #{simple_decoder_forward.11} parent=11 // pred_check
          %p118 = pneg %p56
        $region14: #{simple_decoder_forward.11} parent=11 // pred_check_branch
          %120 = sbr.rel (%p118) target = $region16
        $region15: #{simple_decoder_forward.11} parent=11 // pred_region
          _
        $region16: #{simple_decoder_forward.11} parent=11 // pred_fallthru
          _
        // Predicated region
        $region17: #{simple_decoder_forward.11} parent=11 // pred_check
          %p121 = pneg %p77
        $region18: #{simple_decoder_forward.11} parent=11 // pred_check_branch
          %123 = sbr.rel (%p121) target = $region20
        $region19: #{simple_decoder_forward.11} parent=11 // pred_region
          _
        $region20: #{simple_decoder_forward.11} parent=11 // pred_fallthru
          _
      $region12: #{simple_decoder_forward.11} parent=5 // pred_fallthru
        _
      %p124 = scmp.lt.s32.totalorder %s9, 4
      // Predicated region
      $region21: #{simple_decoder_forward.11} parent=5 // pred_check
        %p125 = pneg %p124
      $region22: #{simple_decoder_forward.11} parent=5 // pred_check_branch
        %127 = sbr.rel (%p125) target = $region24
      $region23: #{simple_decoder_forward.11} parent=5 // pred_region
        // Predicated region
        $region25: #{simple_decoder_forward.11} parent=23 // pred_check
          %p128 = pneg %p29
        $region26: #{simple_decoder_forward.11} parent=23 // pred_check_branch
          %130 = sbr.rel (%p128) target = $region28
        $region27: #{simple_decoder_forward.11} parent=23 // pred_region
          %s131 = sand.u32 %s19, 1
          %s132 = sand.u32 %s19, 1
          %s133 = smul.addr %s132, 144
          %s134 = scalar_lea.vmem [#allocation2], %s133
          %s135 = smul.u32 4, %s9
          %s136 = smul.addr %s135, 4
          %s137 = scalar_lea.vmem %s0, %s136
          // Predicated region
          $region29: #{simple_decoder_forward.11} parent=27 // pred_check
            _
          $region30: #{simple_decoder_forward.11} parent=27 // pred_check_branch
            %139 = sbr.rel (0) target = $region32
          $region31: #{simple_decoder_forward.11} parent=27 // pred_region
            // Predicated region
            $region33: #{simple_decoder_forward.11} parent=31 // pred_check
              _
            $region34: #{simple_decoder_forward.11} parent=31 // pred_check_branch
              %141 = sbr.rel (0) target = $region36
            $region35: #{simple_decoder_forward.11} parent=31 // pred_region
              loop: start=0, step=1, limit=1
              $region37: #{simple_decoder_forward.11} parent=35 // loop_pre_header
                _
              $region38: #{simple_decoder_forward.11} parent=35 // loop_header
                %s143 = sphi 0, %s147
                %p144 = scmp.ge.s32.totalorder %s143, 1
                %s148 = sphi %s137, %s137
                %s149 = sphi %s134, %s134
              $region39: #{simple_decoder_forward.11} parent=35 // loop_header_branch
                %146 = sbr.rel (%p144) target = $region43
              $region40: #{simple_decoder_forward.11} parent=35 // loop_body
                %v150 = vld [vmem:[%s148] sm:$0xff]
                %151 = vst [vmem:[%s149] sm:$0xff] %v150
                %v152 = vld [vmem:[%s148 + $0x8] sm:$0xff]
                %153 = vst [vmem:[%s149 + $0x8] sm:$0xff] %v152
                %v154 = vld [vmem:[%s148 + $0x40] sm:$0xff]
                %155 = vst [vmem:[%s149 + $0x10] sm:$0xff] %v154
                %v156 = vld [vmem:[%s148 + $0x48] sm:$0xff]
                %157 = vst [vmem:[%s149 + $0x18] sm:$0xff] %v156
                %v158 = vld [vmem:[%s148 + $0x80] sm:$0xff]
                %159 = vst [vmem:[%s149 + $0x20] sm:$0xff] %v158
                %v160 = vld [vmem:[%s148 + $0x88] sm:$0xff]
                %161 = vst [vmem:[%s149 + $0x28] sm:$0xff] %v160
                %v162 = vld [vmem:[%s148 + $0xc0] sm:$0xff]
                %163 = vst [vmem:[%s149 + $0x30] sm:$0xff] %v162
                %v164 = vld [vmem:[%s148 + $0xc8] sm:$0xff]
                %165 = vst [vmem:[%s149 + $0x38] sm:$0xff] %v164
                %v166 = vld [vmem:[%s148 + $0x100] sm:$0xff]
                %167 = vst [vmem:[%s149 + $0x40] sm:$0xff] %v166
                %v168 = vld [vmem:[%s148 + $0x108] sm:$0xff]
                %169 = vst [vmem:[%s149 + $0x48] sm:$0xff] %v168
                %v170 = vld [vmem:[%s148 + $0x140] sm:$0xff]
                %171 = vst [vmem:[%s149 + $0x50] sm:$0xff] %v170
                %v172 = vld [vmem:[%s148 + $0x148] sm:$0xff]
                %173 = vst [vmem:[%s149 + $0x58] sm:$0xff] %v172
                %v174 = vld [vmem:[%s148 + $0x180] sm:$0xff]
                %175 = vst [vmem:[%s149 + $0x60] sm:$0xff] %v174
                %v176 = vld [vmem:[%s148 + $0x188] sm:$0xff]
                %177 = vst [vmem:[%s149 + $0x68] sm:$0xff] %v176
                %v178 = vld [vmem:[%s148 + $0x1c0] sm:$0xff]
                %179 = vst [vmem:[%s149 + $0x70] sm:$0xff] %v178
                %v180 = vld [vmem:[%s148 + $0x1c8] sm:$0xff]
                %181 = vst [vmem:[%s149 + $0x78] sm:$0xff] %v180
                %v182 = vld [vmem:[%s148 + $0x200] sm:$0xff]
                %183 = vst [vmem:[%s149 + $0x80] sm:$0xff] %v182
                %v184 = vld [vmem:[%s148 + $0x208] sm:$0xff]
                %185 = vst [vmem:[%s149 + $0x88] sm:$0xff] %v184
              $region41: #{simple_decoder_forward.11} parent=35 // loop_footer
                %s147 = sadd.s32 1, %s143
              $region42: #{simple_decoder_forward.11} parent=35 // loop_footer_branch
                %142 = sbr.rel target = $region38
              $region43: #{simple_decoder_forward.11} parent=35 // loop_exit
                _
            $region36: #{simple_decoder_forward.11} parent=31 // pred_fallthru
              _
            // Predicated region
            $region44: #{simple_decoder_forward.11} parent=31 // pred_check
              _
            $region45: #{simple_decoder_forward.11} parent=31 // pred_check_branch
              %187 = sbr.rel target = $region47
            $region46: #{simple_decoder_forward.11} parent=31 // pred_region
              _
            $region47: #{simple_decoder_forward.11} parent=31 // pred_fallthru
              _
          $region32: #{simple_decoder_forward.11} parent=27 // pred_fallthru
            _
          %188 = vnop
        $region28: #{simple_decoder_forward.11} parent=23 // pred_fallthru
          _
      $region24: #{simple_decoder_forward.11} parent=5 // pred_fallthru
        _
      %p189 = scmp.le.s32.totalorder 1, %s9
      %p190 = scmp.lt.s32.totalorder %s9, 5
      %p191 = pnand %p189, %p190
      %p192 = pneg %p191
      // Predicated region
      $region48: #{simple_decoder_forward.11} parent=5 // pred_check
        _
      $region49: #{simple_decoder_forward.11} parent=5 // pred_check_branch
        %194 = sbr.rel (%p191) target = $region51
      $region50: #{simple_decoder_forward.11} parent=5 // pred_region
        %s195 = ssub.s32 %s9, 1
        %s196 = sand.u32 %s22, 1
        %s197 = sand.u32 %s22, 1
        %s198 = smul.addr %s197, 144
        %s199 = scalar_lea.vmem [#allocation2], %s198
        // Predicated region
        $region52: #{simple_decoder_forward.11} parent=50 // pred_check
          %p200 = pneg %p35
        $region53: #{simple_decoder_forward.11} parent=50 // pred_check_branch
          %202 = sbr.rel (%p200) target = $region55
        $region54: #{simple_decoder_forward.11} parent=50 // pred_region
          _
        $region55: #{simple_decoder_forward.11} parent=50 // pred_fallthru
          _
        %s203 = sand.u32 %s22, 1
        %s204 = sand.u32 %s22, 1
        %s205 = smul.addr %s204, 144
        %s206 = scalar_lea.vmem [#allocation2], %s205
        %p207 = pneg %p35
        %p208 = pneg %p32
        %p209 = pneg %p56
        %p210 = pneg %p53
        %p211 = pneg %p77
        %p212 = pneg %p74
        %p213 = pneg %p103
        %p214 = pneg %p100
        %s215 = smul.u32 4, %s14
        %p216 = scmp.lt.s32.totalorder %s215, 15
        %s217 = scalar_select %p216, %s215, 15
        %s218 = smul.addr %s217, 4
        %s219 = scalar_lea.vmem %s3, %s218
        %s220 = smul.u32 4, %s14
        %s221 = smul.u32 4, %s14
        %p222 = scmp.lt.s32.totalorder %s221, 15
        %s223 = scalar_select %p222, %s221, 15
        %s224 = smul.addr %s223, 4
        %s225 = scalar_lea.vmem %s3, %s224
        %s226 = smul.u32 4, %s14
        %v228 = vld [vmem:[%s1] sm:$0x3]
        %v229 = vld [vmem:[%s199] sm:$0xff]
        %v230 = vld [vmem:[%s199 + $0x8] sm:$0xff]
        %v231 = vld [vmem:[%s199 + $0x10] sm:$0xff]
        %v232 = vld [vmem:[%s199 + $0x18] sm:$0xff]
        %v233 = vld [vmem:[%s199 + $0x20] sm:$0xff]
        %v234 = vld [vmem:[%s199 + $0x28] sm:$0xff]
        %v235 = vld [vmem:[%s199 + $0x30] sm:$0xff]
        %v236 = vld [vmem:[%s199 + $0x38] sm:$0xff]
        %v237 = vld [vmem:[%s199 + $0x40] sm:$0xff]
        %v238 = vld [vmem:[%s199 + $0x48] sm:$0xff]
        %v239 = vld [vmem:[%s199 + $0x50] sm:$0xff]
        %v240 = vld [vmem:[%s199 + $0x58] sm:$0xff]
        %v241 = vld [vmem:[%s199 + $0x60] sm:$0xff]
        %v242 = vld [vmem:[%s199 + $0x68] sm:$0xff]
        %v243 = vld [vmem:[%s199 + $0x70] sm:$0xff]
        %v244 = vld [vmem:[%s199 + $0x78] sm:$0xff]
        %v245 = vld [vmem:[%s199 + $0x80] sm:$0xff]
        %v246 = vld [vmem:[%s199 + $0x88] sm:$0xff]
        %v247 = vld [vmem:[%s2] sm:$0x7]
        %249 = vset.pattern.permute.xlu0 0
        %250 = vperm.xlu0 %249, %v247
        %v251 = vpop.permute.xlu0 %250
        %v271 = vunpack.c.l.b16 %v229
        %v272 = vunpack.c.h.b16 %v229
        %v273 = vunpack.c.l.b16 %v230
        %v274 = vunpack.c.h.b16 %v230
        %v275 = vunpack.c.l.b16 %v231
        %v276 = vunpack.c.h.b16 %v231
        %v277 = vunpack.c.l.b16 %v232
        %v278 = vunpack.c.h.b16 %v232
        %v279 = vunpack.c.l.b16 %v233
        %v280 = vunpack.c.h.b16 %v233
        %v281 = vunpack.c.l.b16 %v234
        %v282 = vunpack.c.h.b16 %v234
        %v283 = vunpack.c.l.b16 %v235
        %v284 = vunpack.c.h.b16 %v235
        %v285 = vunpack.c.l.b16 %v236
        %v286 = vunpack.c.h.b16 %v236
        %v287 = vunpack.c.l.b16 %v237
        %v288 = vunpack.c.h.b16 %v237
        %v289 = vunpack.c.l.b16 %v238
        %v290 = vunpack.c.h.b16 %v238
        %v291 = vunpack.c.l.b16 %v239
        %v292 = vunpack.c.h.b16 %v239
        %v293 = vunpack.c.l.b16 %v240
        %v294 = vunpack.c.h.b16 %v240
        %v295 = vunpack.c.l.b16 %v241
        %v296 = vunpack.c.h.b16 %v241
        %v297 = vunpack.c.l.b16 %v242
        %v298 = vunpack.c.h.b16 %v242
        %v299 = vunpack.c.l.b16 %v243
        %v300 = vunpack.c.h.b16 %v243
        %v301 = vunpack.c.l.b16 %v244
        %v302 = vunpack.c.h.b16 %v244
        %v303 = vunpack.c.l.b16 %v245
        %v304 = vunpack.c.h.b16 %v245
        %v305 = vunpack.c.l.b16 %v246
        %v306 = vunpack.c.h.b16 %v246
        %v307 = vpack.c.b16 %v275, %v271
        %v308 = vpack.c.b16 %v276, %v272
        %v309 = vpack.c.b16 %v277, %v273
        %v310 = vpack.c.b16 %v278, %v274
        %v311 = vpack.c.b16 %v283, %v279
        %v312 = vpack.c.b16 %v284, %v280
        %v313 = vpack.c.b16 %v285, %v281
        %v314 = vpack.c.b16 %v286, %v282
        %v315 = vpack.c.b16 %v291, %v287
        %v316 = vpack.c.b16 %v292, %v288
        %v317 = vpack.c.b16 %v293, %v289
        %v318 = vpack.c.b16 %v294, %v290
        %v319 = vpack.c.b16 %v299, %v295
        %v320 = vpack.c.b16 %v300, %v296
        %v321 = vpack.c.b16 %v301, %v297
        %v322 = vpack.c.b16 %v302, %v298
        %v323 = vpack.c.b16 %v303, %v303
        %v324 = vpack.c.b16 %v304, %v304
        %v325 = vpack.c.b16 %v305, %v305
        %v326 = vpack.c.b16 %v306, %v306
        %vm343 = vcmask 588800
        %v345 = vsel %vm343, %v228, 0
        %vm347 = vcmask 1043456
        %v349 = vsel %vm347, %v323, 0
        %v352 = vsel %vm347, %v324, 0
        %v355 = vsel %vm347, %v325, 0
        %v358 = vsel %vm347, %v326, 0
        %360 = vmatprep.subr.bf16.mxu0 0
        %361 = vmatpush1.bf16.msra.mxu0 0
        %362 = vmatprep.subr.bf16.mxu0 0
        %363 = vmatpush1.bf16.msra.mxu0 0
        %364 = vmatprep.subr.bf16.mxu0 0
        %365 = vmatpush1.bf16.msra.mxu0 0
        %366 = vmatprep.subr.bf16.mxu0 %v352
        %367 = vmatpush1.bf16.msra.mxu0 %v349
        %368 = vmatprep.subr.bf16.mxu0 %v320
        %369 = vmatpush1.bf16.msra.mxu0 %v319
        %370 = vmatprep.subr.bf16.mxu0 %v316
        %371 = vmatpush1.bf16.msra.mxu0 %v315
        %372 = vmatprep.subr.bf16.mxu0 %v312
        %373 = vmatpush1.bf16.msra.mxu0 %v311
        %374 = vmatprep.subr.bf16.mxu0 %v308
        %375 = vmatpush1.bf16.msra.mxu0 %v307
        %376 = vmatprep.subr.bf16.mxu0 0
        %377 = vmatpush2.bf16.msra.mxu0 0
        %378 = vmatprep.subr.bf16.mxu0 0
        %379 = vmatpush2.bf16.msra.mxu0 0
        %380 = vmatprep.subr.bf16.mxu0 0
        %381 = vmatpush2.bf16.msra.mxu0 0
        %382 = vmatprep.subr.bf16.mxu0 0
        %383 = vmatpush2.bf16.msra.mxu0 0
        %384 = vmatprep.subr.bf16.mxu0 0
        %385 = vmatpush2.bf16.msra.mxu0 0
        %386 = vmatprep.subr.bf16.mxu0 0
        %387 = vmatpush2.bf16.msra.mxu0 0
        %388 = vmatprep.subr.bf16.mxu0 0
        %389 = vmatpush2.bf16.msra.mxu0 0
        %390 = vmatprep.subr.bf16.mxu0 0
        %391 = vmatpush2.bf16.msra.mxu0 0
        %392 = vmatprep.mubr.bf16.mxu0 0
        %393 = vmatmul.mubr.bf16.gmra.mxu0 %v345
        %v394 = vpop.f32.mrf.mxu0
        %v395 = vadd.f32 %v251, %v394
        %v396 = vpop.f32.mrf.mxu0
        %v397 = vadd.f32 %v251, %v396
        %v398 = vpop.f32.mrf.mxu0
        %v399 = vpop.f32.mrf.mxu0
        %400 = vdwg.mxu0
        %401 = vmatprep.subr.bf16.mxu0 0
        %402 = vmatpush1.bf16.msra.mxu0 0
        %403 = vmatprep.subr.bf16.mxu0 0
        %404 = vmatpush1.bf16.msra.mxu0 0
        %405 = vmatprep.subr.bf16.mxu0 0
        %406 = vmatpush1.bf16.msra.mxu0 0
        %407 = vmatprep.subr.bf16.mxu0 %v358
        %408 = vmatpush1.bf16.msra.mxu0 %v355
        %409 = vmatprep.subr.bf16.mxu0 %v322
        %410 = vmatpush1.bf16.msra.mxu0 %v321
        %411 = vmatprep.subr.bf16.mxu0 %v318
        %412 = vmatpush1.bf16.msra.mxu0 %v317
        %413 = vmatprep.subr.bf16.mxu0 %v314
        %414 = vmatpush1.bf16.msra.mxu0 %v313
        %415 = vmatprep.subr.bf16.mxu0 %v310
        %416 = vmatpush1.bf16.msra.mxu0 %v309
        %417 = vmatprep.subr.bf16.mxu0 0
        %418 = vmatpush2.bf16.msra.mxu0 0
        %419 = vmatprep.subr.bf16.mxu0 0
        %420 = vmatpush2.bf16.msra.mxu0 0
        %421 = vmatprep.subr.bf16.mxu0 0
        %422 = vmatpush2.bf16.msra.mxu0 0
        %423 = vmatprep.subr.bf16.mxu0 0
        %424 = vmatpush2.bf16.msra.mxu0 0
        %425 = vmatprep.subr.bf16.mxu0 0
        %426 = vmatpush2.bf16.msra.mxu0 0
        %427 = vmatprep.subr.bf16.mxu0 0
        %428 = vmatpush2.bf16.msra.mxu0 0
        %429 = vmatprep.subr.bf16.mxu0 0
        %430 = vmatpush2.bf16.msra.mxu0 0
        %431 = vmatprep.subr.bf16.mxu0 0
        %432 = vmatpush2.bf16.msra.mxu0 0
        %433 = vmatprep.mubr.bf16.mxu0 0
        %434 = vmatmul.mubr.bf16.gmra.mxu0 %v345
        %v435 = vpop.f32.mrf.mxu0
        %v436 = vadd.f32 %v251, %v435
        %v437 = vpop.f32.mrf.mxu0
        %v438 = vadd.f32 %v251, %v437
        %v439 = vpop.f32.mrf.mxu0
        %v440 = vpop.f32.mrf.mxu0
        %441 = vdwg.mxu0
        %v442 = vtanh.pop %v395
        %v443 = vtanh.pop %v397
        %v444 = vtanh.pop %v436
        %v445 = vtanh.pop %v438
        %v450 = vcombine.low %v442, %v443
        %v451 = vcombine.low %v444, %v445
        %454 = vst [vmem:[%s225] sm:$0x77] %v450
        %455 = vst [vmem:[%s225 + $0x8] sm:$0x77] %v451
        %s456 = smul.u32 4, %s14
        %p457 = scmp.lt.s32.totalorder %s456, 15
        %s458 = scalar_select %p457, %s456, 15
        %s459 = smul.addr %s458, 4
        %s460 = scalar_lea.vmem %s3, %s459
        // Predicated region
        $region56: #{simple_decoder_forward.11} parent=50 // pred_check
          %p461 = pneg %p100
        $region57: #{simple_decoder_forward.11} parent=50 // pred_check_branch
          %463 = sbr.rel (%p461) target = $region59
        $region58: #{simple_decoder_forward.11} parent=50 // pred_region
          %s464 = smul.u32 4, %s14
        $region59: #{simple_decoder_forward.11} parent=50 // pred_fallthru
          _
      $region51: #{simple_decoder_forward.11} parent=5 // pred_fallthru
        _
      %p465 = scmp.le.s32.totalorder 2, %s9
      // Predicated region
      $region60: #{simple_decoder_forward.11} parent=5 // pred_check
        %p466 = pneg %p465
      $region61: #{simple_decoder_forward.11} parent=5 // pred_check_branch
        %468 = sbr.rel (%p466) target = $region63
      $region62: #{simple_decoder_forward.11} parent=5 // pred_region
        %s469 = ssub.s32 %s9, 2
        // Predicated region
        $region64: #{simple_decoder_forward.11} parent=62 // pred_check
          %p470 = pneg %p106
        $region65: #{simple_decoder_forward.11} parent=62 // pred_check_branch
          %472 = sbr.rel (%p470) target = $region67
        $region66: #{simple_decoder_forward.11} parent=62 // pred_region
          %s473 = smul.u32 4, %s15
          %p474 = scmp.lt.s32.totalorder %s473, 15
          %s475 = scalar_select %p474, %s473, 15
          %s476 = smul.addr %s475, 4
          %s477 = scalar_lea.vmem %s3, %s476
        $region67: #{simple_decoder_forward.11} parent=62 // pred_fallthru
          _
      $region63: #{simple_decoder_forward.11} parent=5 // pred_fallthru
        _
    $region6: #{simple_decoder_forward.11} parent=1 // loop_footer
      %s13 = sadd.s32 1, %s9
    $region7: #{simple_decoder_forward.11} parent=1 // loop_footer_branch
      %8 = sbr.rel target = $region3
    $region8: #{simple_decoder_forward.11} parent=1 // loop_exit
      _

</llo_original>
